<compile_context>
chip_gen: v7x
topology: tpu7x:2x2x1
jax: 0.10.0
libtpu: 0.0.40
codegen_flags: <defaults>
</compile_context>

<pallas_src>
import jax
import jax.numpy as jnp
from jax.experimental import pallas as pl
from jax.experimental.pallas import tpu as pltpu

K_IN = 4096     # input features
H_RAW = 64      # true hidden width
H_PAD = 128     # lane-dense (padded) hidden width
BN_EPS = 1e-5

# Packed small-parameter rows (one (8,128) f32 array).
_ROW_B1, _ROW_G1, _ROW_BE1, _ROW_B2, _ROW_G2, _ROW_BE2, _ROW_WO, _ROW_BO = range(8)


def _bn_train(h, gamma, beta, eps=BN_EPS):
    """BatchNorm1d, training-mode batch statistics, single pass over h."""
    n = h.shape[0]
    mu = jnp.sum(h, axis=0, keepdims=True) / n
    var = jnp.maximum(jnp.sum(h * h, axis=0, keepdims=True) / n - mu * mu, 0.0)
    return (h - mu) * jax.lax.rsqrt(var + eps) * gamma + beta


def _head(h1, w2, small):
    """BN1 -> layer_2 (bf16 MXU) -> ReLU -> BN2 -> layer_out (VPU) -> sigmoid."""
    g1, be1 = small[_ROW_G1:_ROW_G1 + 1, :], small[_ROW_BE1:_ROW_BE1 + 1, :]
    b2 = small[_ROW_B2:_ROW_B2 + 1, :]
    g2, be2 = small[_ROW_G2:_ROW_G2 + 1, :], small[_ROW_BE2:_ROW_BE2 + 1, :]
    wo, bo = small[_ROW_WO:_ROW_WO + 1, :], small[_ROW_BO:_ROW_BO + 1, 0:1]

    h = _bn_train(h1, g1, be1)
    h2 = jnp.dot(h.astype(jnp.bfloat16), w2, preferred_element_type=jnp.float32)
    h2 = jnp.maximum(h2 + b2, 0.0)
    h2 = _bn_train(h2, g2, be2)
    # layer_out: N=1 matmul replaced by VPU multiply + lane reduction.
    logit = jnp.sum(h2 * wo, axis=-1, keepdims=True) + bo
    return jax.nn.sigmoid(logit)


# ----------------------------- kernels ---------------------------------------

def _fused_kernel(x_ref, w1_ref, w2_ref, small_ref, o_ref, acc_ref):
    """Single-kernel path: whole batch resident, K streamed over the grid."""
    k = pl.program_id(0)

    @pl.when(k == 0)
    def _():
        acc_ref[...] = jnp.zeros_like(acc_ref)

    # Streamed layer_1 partial product; x cast to bf16 on the VPU, under the DMA.
    acc_ref[...] += jnp.dot(x_ref[...].astype(jnp.bfloat16), w1_ref[...],
                            preferred_element_type=jnp.float32)

    @pl.when(k == pl.num_programs(0) - 1)
    def _():
        b1 = small_ref[_ROW_B1:_ROW_B1 + 1, :]
        h1 = jnp.maximum(acc_ref[...] + b1, 0.0)
        o_ref[...] = _head(h1, w2_ref[...], small_ref[...])


def _layer1_kernel(x_ref, w1_ref, small_ref, h1_ref, acc_ref):
    """Batch-tiled layer_1: grid (n_b parallel, n_k arbitrary)."""
    k = pl.program_id(1)

    @pl.when(k == 0)
    def _():
        acc_ref[...] = jnp.zeros_like(acc_ref)

    acc_ref[...] += jnp.dot(x_ref[...].astype(jnp.bfloat16), w1_ref[...],
                            preferred_element_type=jnp.float32)

    @pl.when(k == pl.num_programs(1) - 1)
    def _():
        b1 = small_ref[_ROW_B1:_ROW_B1 + 1, :]
        h1_ref[...] = jnp.maximum(acc_ref[...] + b1, 0.0)


def _epilogue_kernel(h1_ref, w2_ref, small_ref, o_ref):
    """Whole-batch epilogue (needs full-batch BN statistics)."""
    o_ref[...] = _head(h1_ref[...], w2_ref[...], small_ref[...])


# ----------------------------- host-side setup --------------------------------

def _prepare_params(params):
    """Pad hidden dim 64->128 (all pads zero => exact), cast weights to bf16,
    pack the small per-feature parameters into one (8, 128) f32 array."""
    (w1, b1, g1, be1, w2, b2, g2, be2, wo, bo) = params
    dh = H_PAD - H_RAW
    w1p = jnp.pad(w1, ((0, 0), (0, dh))).astype(jnp.bfloat16)     # (4096, 128)
    w2p = jnp.pad(w2, ((0, dh), (0, dh))).astype(jnp.bfloat16)    # (128, 128)

    def row(v):
        return jnp.pad(jnp.asarray(v, jnp.float32).reshape(1, H_RAW),
                       ((0, 0), (0, dh)))

    small = jnp.concatenate(
        [row(b1), row(g1), row(be1), row(b2), row(g2), row(be2), row(wo),
         jnp.full((1, H_PAD), jnp.asarray(bo, jnp.float32).reshape(()))],
        axis=0)                                                    # (8, 128) f32
    return w1p, w2p, small


def _vmem_limit_bytes():
    """Generation-aware scoped-VMEM limit with safe fallback."""
    try:
        cap = int(pltpu.get_tpu_info().vmem_capacity_bytes)
    except Exception:
        cap = 64 * 1024 * 1024     # conservative: valid on every generation
    return max(32 * 1024 * 1024, min(int(cap * 3 // 4), 96 * 1024 * 1024))


def _choose_tk(rows, vmem_limit):
    """Largest K tile whose double-buffered f32 x and bf16 w1 tiles fit the
    VMEM budget after accounting for accumulator, output, w2 and packed params."""
    fixed = (rows * H_PAD * 4              # f32 accumulator scratch
             + 2 * rows * H_PAD * 4        # output block (lane-padded), 2 buffers
             + 2 * H_PAD * H_PAD * 2       # w2 (bf16), 2 buffers
             + 2 * 8 * H_PAD * 4)          # packed small params, 2 buffers
    budget = vmem_limit - fixed - 4 * 1024 * 1024   # compiler headroom
    for tk in (4096, 2048, 1024, 512, 256, 128):
        per_tk = 2 * rows * tk * 4 + 2 * tk * H_PAD * 2
        if K_IN % tk == 0 and per_tk <= budget:
            return tk
    return 128


def _default_batch_tile(B):
    if B <= 1024:
        return None                       # fused single-kernel path
    for tb in (1024, 512, 256, 128):
        if B % tb == 0:
            return tb
    return None  # TODO(synk): pad/remainder handling for batch sizes not divisible by 128


def _forward_fused(x, w1p, w2p, small, vmem_limit):
    B = x.shape[0]
    tk = _choose_tk(B, vmem_limit)
    n_k = K_IN // tk

    grid_spec = pltpu.PrefetchScalarGridSpec(
        num_scalar_prefetch=0,
        grid=(n_k,),
        in_specs=[
            pl.BlockSpec((B, tk), lambda k: (0, k)),         # x (f32), streamed over K
            pl.BlockSpec((tk, H_PAD), lambda k: (k, 0)),     # w1 (bf16), streamed over K
            pl.BlockSpec((H_PAD, H_PAD), lambda k: (0, 0)),  # w2 (bf16), VMEM-resident
            pl.BlockSpec((8, H_PAD), lambda k: (0, 0)),      # packed small params
        ],
        out_specs=pl.BlockSpec((B, 1), lambda k: (0, 0)),
        scratch_shapes=[pltpu.VMEM((B, H_PAD), jnp.float32)],
    )
    cost = pl.CostEstimate(
        flops=2 * B * K_IN * H_PAD + 2 * B * H_PAD * H_PAD + 8 * B * H_PAD,
        transcendentals=B + 4 * H_PAD,
        bytes_accessed=B * K_IN * 4 + K_IN * H_PAD * 2 + H_PAD * H_PAD * 2
        + 8 * H_PAD * 4 + B * 4,
    )
    return pl.pallas_call(
        _fused_kernel,
        out_shape=jax.ShapeDtypeStruct((B, 1), jnp.float32),
        grid_spec=grid_spec,
        compiler_params=pltpu.CompilerParams(
            dimension_semantics=("arbitrary",),
            vmem_limit_bytes=vmem_limit,
        ),
        cost_estimate=cost,
    )(x, w1p, w2p, small)


def _forward_batch_tiled(x, w1p, w2p, small, vmem_limit, tb):
    B = x.shape[0]
    assert B % tb == 0
    n_b = B // tb
    tk = _choose_tk(tb, vmem_limit)
    n_k = K_IN // tk

    grid_spec = pltpu.PrefetchScalarGridSpec(
        num_scalar_prefetch=0,
        grid=(n_b, n_k),
        in_specs=[
            pl.BlockSpec((tb, tk), lambda b, k: (b, k)),     # x (f32)
            pl.BlockSpec((tk, H_PAD), lambda b, k: (k, 0)),  # w1 (bf16)
            pl.BlockSpec((8, H_PAD), lambda b, k: (0, 0)),   # packed small params
        ],
        out_specs=pl.BlockSpec((tb, H_PAD), lambda b, k: (b, 0)),
        scratch_shapes=[pltpu.VMEM((tb, H_PAD), jnp.float32)],
    )
    h1 = pl.pallas_call(
        _layer1_kernel,
        out_shape=jax.ShapeDtypeStruct((B, H_PAD), jnp.float32),
        grid_spec=grid_spec,
        compiler_params=pltpu.CompilerParams(
            dimension_semantics=("parallel", "arbitrary"),   # batch axis -> both TCs
            vmem_limit_bytes=vmem_limit,
        ),
    )(x, w1p, small)

    # Whole-batch epilogue: BN needs full-batch statistics; the (B,128) hidden
    # activations stay resident in VMEM for this tiny kernel.
    return pl.pallas_call(
        _epilogue_kernel,
        out_shape=jax.ShapeDtypeStruct((B, 1), jnp.float32),
        compiler_params=pltpu.CompilerParams(vmem_limit_bytes=vmem_limit),
    )(h1, w2p, small)


def binary_classification_forward(x, params, *, batch_tile=None):
    """x: (B, 4096) float32 -> (B, 1) float32 sigmoid probabilities."""
    B, K = x.shape
    assert K == K_IN, f"expected {K_IN} input features, got {K}"
    x = x.astype(jnp.float32)                     # streamed f32; cast in-kernel
    w1p, w2p, small = _prepare_params(params)
    vmem_limit = _vmem_limit_bytes()

    if batch_tile is None:
        batch_tile = _default_batch_tile(B)
    if batch_tile is not None and batch_tile < B and B % batch_tile == 0:
        return _forward_batch_tiled(x, w1p, w2p, small, vmem_limit, batch_tile)
    return _forward_fused(x, w1p, w2p, small, vmem_limit)


def init_params(key):
    """PyTorch nn.Linear default init: U(-1/sqrt(fan_in), 1/sqrt(fan_in))."""
    def linear(key, fan_in, fan_out):
        kw, kb = jax.random.split(key)
        bound = 1.0 / jnp.sqrt(float(fan_in))
        w = jax.random.uniform(kw, (fan_in, fan_out), jnp.float32, -bound, bound)
        b = jax.random.uniform(kb, (1, fan_out), jnp.float32, -bound, bound)
        return w, b

    k1, k2, k3 = jax.random.split(key, 3)
    w1, b1 = linear(k1, K_IN, H_RAW)
    w2, b2 = linear(k2, H_RAW, H_RAW)
    wo, bo = linear(k3, H_RAW, 1)
    # BatchNorm1d affine params: gamma=1, beta=0
    g1 = jnp.ones((1, H_RAW), jnp.float32)
    be1 = jnp.zeros((1, H_RAW), jnp.float32)
    g2 = jnp.ones((1, H_RAW), jnp.float32)
    be2 = jnp.zeros((1, H_RAW), jnp.float32)
    return (w1, b1, g1, be1, w2, b2, g2, be2, wo, bo)


def _reference(x, params, matched_precision=True):
    """Pure-JAX reference; matched_precision mirrors the kernel's bf16 MXU operands."""
    (w1, b1, g1, be1, w2, b2, g2, be2, wo, bo) = params
    if matched_precision:
        h = jnp.dot(x.astype(jnp.bfloat16), w1.astype(jnp.bfloat16),
                    preferred_element_type=jnp.float32) + b1
    else:
        h = x @ w1 + b1
    h = _bn_train(jnp.maximum(h, 0.0), g1, be1)
    if matched_precision:
        h2 = jnp.dot(h.astype(jnp.bfloat16), w2.astype(jnp.bfloat16),
                     preferred_element_type=jnp.float32) + b2
    else:
        h2 = h @ w2 + b2
    h2 = _bn_train(jnp.maximum(h2, 0.0), g2, be2)
    return jax.nn.sigmoid(h2 @ wo + bo)


if __name__ == "__main__":
    key = jax.random.PRNGKey(0)
    kx, kp = jax.random.split(key)
    params = init_params(kp)

    # --- small batch: fully fused single-kernel path -------------------------
    B = 8
    x = jax.random.normal(kx, (B, K_IN), dtype=jnp.float32)
    out = jax.block_until_ready(binary_classification_forward(x, params))
    assert out.shape == (B, 1), out.shape
    ref = _reference(x, params, matched_precision=True)
    assert jnp.allclose(out, ref, atol=1e-2), (out, ref)
    ref_f32 = _reference(x, params, matched_precision=False)
    assert jnp.allclose(out, ref_f32, atol=6e-2), (out, ref_f32)

    # --- batch-tiled ("parallel" batch axis) path, forced at a small size ----
    B2 = 256
    x2 = jax.random.normal(jax.random.fold_in(kx, 1), (B2, K_IN), dtype=jnp.float32)
    out2 = jax.block_until_ready(
        binary_classification_forward(x2, params, batch_tile=128))
    assert out2.shape == (B2, 1), out2.shape
    ref2 = _reference(x2, params, matched_precision=True)
    assert jnp.allclose(out2, ref2, atol=1e-2), (out2, ref2)

    print("KERNEL_OK")
</pallas_src>

<mosaic_0001>
module attributes {stable_mosaic.version = 11 : i64} {
  func.func @_fused_kernel(%arg0: i32, %arg1: memref<8x4096xf32, #tpu.memory_space<vmem>>, %arg2: memref<4096x128xbf16, #tpu.memory_space<vmem>>, %arg3: memref<128x128xbf16, #tpu.memory_space<vmem>>, %arg4: memref<8x128xf32, #tpu.memory_space<vmem>>, %arg5: memref<8x1xf32, #tpu.memory_space<vmem>>, %arg6: memref<8x128xf32, #tpu.memory_space<vmem>>) attributes {dimension_semantics = [#tpu.dimension_semantics<arbitrary>], iteration_bounds = array<i64: 1>, scalar_prefetch = 0 : i64, scratch_operands = 1 : i64, tpu.core_type = #tpu.core_type<tc>, window_params = [{transform_indices = @transform_0, window_bounds = array<i64: 8, 4096>}, {transform_indices = @transform_1, window_bounds = array<i64: 4096, 128>}, {pipeline_mode = #tpu.pipeline_mode<synchronous>, transform_indices = @transform_2, window_bounds = array<i64: 128, 128>}, {pipeline_mode = #tpu.pipeline_mode<synchronous>, transform_indices = @transform_3, window_bounds = array<i64: 8, 128>}, {pipeline_mode = #tpu.pipeline_mode<synchronous>, transform_indices = @transform_4, window_bounds = array<i64: 8, 1>}]} {
    %c0_i32 = arith.constant 0 : i32
    %0 = arith.cmpi eq, %arg0, %c0_i32 : i32
    %1 = arith.extui %0 : i1 to i32
    %c0_i32_0 = arith.constant 0 : i32
    %2 = arith.cmpi ne, %1, %c0_i32_0 : i32
    scf.if %2 {
      %cst_10 = arith.constant 0.000000e+00 : f32
      %13 = vector.broadcast %cst_10 : f32 to vector<8x128xf32>
      %c0_11 = arith.constant 0 : index
      %c0_12 = arith.constant 0 : index
      %14 = vector.load %arg6[%c0_11, %c0_12] : memref<8x128xf32, #tpu.memory_space<vmem>>, vector<8x128xf32>
      tpu.vector_store %arg6[%c0_11, %c0_12], %13 {strides = array<i32>} : memref<8x128xf32, #tpu.memory_space<vmem>>, vector<8x128xf32>,
    } else {
    }
    %c0 = arith.constant 0 : index
    %c0_1 = arith.constant 0 : index
    %3 = vector.load %arg6[%c0, %c0_1] : memref<8x128xf32, #tpu.memory_space<vmem>>, vector<8x128xf32>
    %c0_2 = arith.constant 0 : index
    %c0_3 = arith.constant 0 : index
    %4 = vector.load %arg1[%c0_2, %c0_3] : memref<8x4096xf32, #tpu.memory_space<vmem>>, vector<8x4096xf32>
    %5 = arith.truncf %4 : vector<8x4096xf32> to vector<8x4096xbf16>
    %c0_4 = arith.constant 0 : index
    %c0_5 = arith.constant 0 : index
    %6 = vector.load %arg2[%c0_4, %c0_5] : memref<4096x128xbf16, #tpu.memory_space<vmem>>, vector<4096x128xbf16>
    %cst = arith.constant dense<0.000000e+00> : vector<8x128xf32>
    %7 = tpu.matmul %5, %6, %cst {dimension_numbers = #tpu.dot_dimension_numbers<[1], [0], [0], [1], [0, 0, 1, 1], [], []>} : vector<8x4096xbf16>, vector<4096x128xbf16>, vector<8x128xf32> -> vector<8x128xf32>
    %8 = arith.addf %3, %7 : vector<8x128xf32>
    %c0_6 = arith.constant 0 : index
    %c0_7 = arith.constant 0 : index
    %9 = vector.load %arg6[%c0_6, %c0_7] : memref<8x128xf32, #tpu.memory_space<vmem>>, vector<8x128xf32>
    tpu.vector_store %arg6[%c0_6, %c0_7], %8 {strides = array<i32>} : memref<8x128xf32, #tpu.memory_space<vmem>>, vector<8x128xf32>,
    %c0_i32_8 = arith.constant 0 : i32
    %10 = arith.cmpi eq, %arg0, %c0_i32_8 : i32
    %11 = arith.extui %10 : i1 to i32
    %c0_i32_9 = arith.constant 0 : i32
    %12 = arith.cmpi ne, %11, %c0_i32_9 : i32
    scf.if %12 {
      %c0_10 = arith.constant 0 : index
      %c0_11 = arith.constant 0 : index
      %13 = vector.load %arg4[%c0_10, %c0_11] : memref<8x128xf32, #tpu.memory_space<vmem>>, vector<1x128xf32>
      %c0_12 = arith.constant 0 : index
      %c0_13 = arith.constant 0 : index
      %14 = vector.load %arg6[%c0_12, %c0_13] : memref<8x128xf32, #tpu.memory_space<vmem>>, vector<8x128xf32>
      %15 = vector.broadcast %13 : vector<1x128xf32> to vector<8x128xf32>
      %16 = arith.addf %14, %15 : vector<8x128xf32>
      %cst_14 = arith.constant 0.000000e+00 : f32
      %17 = vector.broadcast %cst_14 : f32 to vector<8x128xf32>
      %18 = arith.maximumf %16, %17 : vector<8x128xf32>
      %c0_15 = arith.constant 0 : index
      %c0_16 = arith.constant 0 : index
      %19 = vector.load %arg3[%c0_15, %c0_16] : memref<128x128xbf16, #tpu.memory_space<vmem>>, vector<128x128xbf16>
      %c0_17 = arith.constant 0 : index
      %c0_18 = arith.constant 0 : index
      %20 = vector.load %arg4[%c0_17, %c0_18] : memref<8x128xf32, #tpu.memory_space<vmem>>, vector<8x128xf32>
      %21 = vector.extract_strided_slice %20 {offsets = [1, 0], sizes = [1, 128], strides = [1, 1]} : vector<8x128xf32> to vector<1x128xf32>
      %22 = vector.extract_strided_slice %20 {offsets = [2, 0], sizes = [1, 128], strides = [1, 1]} : vector<8x128xf32> to vector<1x128xf32>
      %23 = vector.extract_strided_slice %20 {offsets = [3, 0], sizes = [1, 128], strides = [1, 1]} : vector<8x128xf32> to vector<1x128xf32>
      %24 = vector.extract_strided_slice %20 {offsets = [4, 0], sizes = [1, 128], strides = [1, 1]} : vector<8x128xf32> to vector<1x128xf32>
      %25 = vector.extract_strided_slice %20 {offsets = [5, 0], sizes = [1, 128], strides = [1, 1]} : vector<8x128xf32> to vector<1x128xf32>
      %26 = vector.extract_strided_slice %20 {offsets = [6, 0], sizes = [1, 128], strides = [1, 1]} : vector<8x128xf32> to vector<1x128xf32>
      %27 = vector.extract_strided_slice %20 {offsets = [7, 0], sizes = [1, 1], strides = [1, 1]} : vector<8x128xf32> to vector<1x1xf32>
      %cst_19 = arith.constant dense<0.000000e+00> : vector<128xf32>
      %28 = vector.multi_reduction <add>, %18, %cst_19 [0] : vector<8x128xf32> to vector<128xf32>
      %29 = vector.shape_cast %28 : vector<128xf32> to vector<1x128xf32>
      %cst_20 = arith.constant 8.000000e+00 : f32
      %30 = vector.broadcast %cst_20 : f32 to vector<1x128xf32>
      %31 = arith.divf %29, %30 : vector<1x128xf32>
      %32 = arith.mulf %18, %18 : vector<8x128xf32>
      %cst_21 = arith.constant dense<0.000000e+00> : vector<128xf32>
      %33 = vector.multi_reduction <add>, %32, %cst_21 [0] : vector<8x128xf32> to vector<128xf32>
      %34 = vector.shape_cast %33 : vector<128xf32> to vector<1x128xf32>
      %cst_22 = arith.constant 8.000000e+00 : f32
      %35 = vector.broadcast %cst_22 : f32 to vector<1x128xf32>
      %36 = arith.divf %34, %35 : vector<1x128xf32>
      %37 = arith.mulf %31, %31 : vector<1x128xf32>
      %38 = arith.subf %36, %37 : vector<1x128xf32>
      %cst_23 = arith.constant 0.000000e+00 : f32
      %39 = vector.broadcast %cst_23 : f32 to vector<1x128xf32>
      %40 = arith.maximumf %38, %39 : vector<1x128xf32>
      %41 = vector.broadcast %31 : vector<1x128xf32> to vector<8x128xf32>
      %42 = arith.subf %18, %41 : vector<8x128xf32>
      %cst_24 = arith.constant 9.99999974E-6 : f32
      %43 = vector.broadcast %cst_24 : f32 to vector<1x128xf32>
      %44 = arith.addf %40, %43 : vector<1x128xf32>
      %45 = math.rsqrt %44 : vector<1x128xf32>
      %46 = vector.broadcast %45 : vector<1x128xf32> to vector<8x128xf32>
      %47 = arith.mulf %42, %46 : vector<8x128xf32>
      %48 = vector.broadcast %21 : vector<1x128xf32> to vector<8x128xf32>
      %49 = arith.mulf %47, %48 : vector<8x128xf32>
      %50 = vector.broadcast %22 : vector<1x128xf32> to vector<8x128xf32>
      %51 = arith.addf %49, %50 : vector<8x128xf32>
      %52 = arith.truncf %51 : vector<8x128xf32> to vector<8x128xbf16>
      %cst_25 = arith.constant dense<0.000000e+00> : vector<8x128xf32>
      %53 = tpu.matmul %52, %19, %cst_25 {dimension_numbers = #tpu.dot_dimension_numbers<[1], [0], [0], [1], [0, 0, 1, 1], [], []>} : vector<8x128xbf16>, vector<128x128xbf16>, vector<8x128xf32> -> vector<8x128xf32>
      %54 = vector.broadcast %23 : vector<1x128xf32> to vector<8x128xf32>
      %55 = arith.addf %53, %54 : vector<8x128xf32>
      %cst_26 = arith.constant 0.000000e+00 : f32
      %56 = vector.broadcast %cst_26 : f32 to vector<8x128xf32>
      %57 = arith.maximumf %55, %56 : vector<8x128xf32>
      %cst_27 = arith.constant dense<0.000000e+00> : vector<128xf32>
      %58 = vector.multi_reduction <add>, %57, %cst_27 [0] : vector<8x128xf32> to vector<128xf32>
      %59 = vector.shape_cast %58 : vector<128xf32> to vector<1x128xf32>
      %cst_28 = arith.constant 8.000000e+00 : f32
      %60 = vector.broadcast %cst_28 : f32 to vector<1x128xf32>
      %61 = arith.divf %59, %60 : vector<1x128xf32>
      %62 = arith.mulf %57, %57 : vector<8x128xf32>
      %cst_29 = arith.constant dense<0.000000e+00> : vector<128xf32>
      %63 = vector.multi_reduction <add>, %62, %cst_29 [0] : vector<8x128xf32> to vector<128xf32>
      %64 = vector.shape_cast %63 : vector<128xf32> to vector<1x128xf32>
      %cst_30 = arith.constant 8.000000e+00 : f32
      %65 = vector.broadcast %cst_30 : f32 to vector<1x128xf32>
      %66 = arith.divf %64, %65 : vector<1x128xf32>
      %67 = arith.mulf %61, %61 : vector<1x128xf32>
      %68 = arith.subf %66, %67 : vector<1x128xf32>
      %cst_31 = arith.constant 0.000000e+00 : f32
      %69 = vector.broadcast %cst_31 : f32 to vector<1x128xf32>
      %70 = arith.maximumf %68, %69 : vector<1x128xf32>
      %71 = vector.broadcast %61 : vector<1x128xf32> to vector<8x128xf32>
      %72 = arith.subf %57, %71 : vector<8x128xf32>
      %cst_32 = arith.constant 9.99999974E-6 : f32
      %73 = vector.broadcast %cst_32 : f32 to vector<1x128xf32>
      %74 = arith.addf %70, %73 : vector<1x128xf32>
      %75 = math.rsqrt %74 : vector<1x128xf32>
      %76 = vector.broadcast %75 : vector<1x128xf32> to vector<8x128xf32>
      %77 = arith.mulf %72, %76 : vector<8x128xf32>
      %78 = vector.broadcast %24 : vector<1x128xf32> to vector<8x128xf32>
      %79 = arith.mulf %77, %78 : vector<8x128xf32>
      %80 = vector.broadcast %25 : vector<1x128xf32> to vector<8x128xf32>
      %81 = arith.addf %79, %80 : vector<8x128xf32>
      %82 = vector.broadcast %26 : vector<1x128xf32> to vector<8x128xf32>
      %83 = arith.mulf %81, %82 : vector<8x128xf32>
      %cst_33 = arith.constant dense<0.000000e+00> : vector<8xf32>
      %84 = vector.multi_reduction <add>, %83, %cst_33 [1] : vector<8x128xf32> to vector<8xf32>
      %85 = vector.shape_cast %84 : vector<8xf32> to vector<8x1xf32>
      %86 = vector.broadcast %27 : vector<1x1xf32> to vector<8x1xf32>
      %87 = arith.addf %85, %86 : vector<8x1xf32>
      %88 = arith.negf %87 : vector<8x1xf32>
      %89 = math.exp %88 : vector<8x1xf32>
      %cst_34 = arith.constant 1.000000e+00 : f32
      %90 = vector.broadcast %cst_34 : f32 to vector<8x1xf32>
      %91 = arith.addf %90, %89 : vector<8x1xf32>
      %92 = arith.divf %90, %91 : vector<8x1xf32>
      %c0_35 = arith.constant 0 : index
      %c0_36 = arith.constant 0 : index
      %93 = vector.load %arg5[%c0_35, %c0_36] : memref<8x1xf32, #tpu.memory_space<vmem>>, vector<8x1xf32>
      tpu.vector_store %arg5[%c0_35, %c0_36], %92 {strides = array<i32>} : memref<8x1xf32, #tpu.memory_space<vmem>>, vector<8x1xf32>,
    } else {
    }
    return
  }
  func.func @transform_0(%arg0: i32) -> (i32, i32) {
    %c0_i32 = arith.constant 0 : i32
    %c0_i32_0 = arith.constant 0 : i32
    return %c0_i32, %arg0 : i32, i32
  }
  func.func @transform_1(%arg0: i32) -> (i32, i32) {
    %c0_i32 = arith.constant 0 : i32
    %c0_i32_0 = arith.constant 0 : i32
    return %arg0, %c0_i32 : i32, i32
  }
  func.func @transform_2(%arg0: i32) -> (i32, i32) {
    %c0_i32 = arith.constant 0 : i32
    %c0_i32_0 = arith.constant 0 : i32
    %c0_i32_1 = arith.constant 0 : i32
    return %c0_i32, %c0_i32_0 : i32, i32
  }
  func.func @transform_3(%arg0: i32) -> (i32, i32) {
    %c0_i32 = arith.constant 0 : i32
    %c0_i32_0 = arith.constant 0 : i32
    %c0_i32_1 = arith.constant 0 : i32
    return %c0_i32, %c0_i32_0 : i32, i32
  }
  func.func @transform_4(%arg0: i32) -> (i32, i32) {
    %c0_i32 = arith.constant 0 : i32
    %c0_i32_0 = arith.constant 0 : i32
    %c0_i32_1 = arith.constant 0 : i32
    return %c0_i32, %c0_i32_0 : i32, i32
  }
}

</mosaic_0001>

<llo_original>
// kernel: tpu_custom_call.1
$region0: #{tpu_custom_call.1}
  #allocation0 [shape = 'u32[]', space=smem, size = 0x4, offset = 0x4, fixed_abs, tag = 'smem constant byte address 0x4 - core index']
  #allocation1 [shape = 'u32[144,128]{1,0:T(1,128)}', space=vmem, size = 0x12000, scoped, tag = 'internal scratch']
  #allocation2 [shape = 'f32[8,128]{1,0:T(8,128)}', space=vmem, size = 0x1000, scoped, tag = 'scratch operand']
  %s0 = inlined_call_operand.hbm [shape: f32[8,4096], index: 0, kind: input, shape index: {}]
  %s1 = inlined_call_operand.hbm [shape: bf16[4096,128], index: 1, kind: input, shape index: {}]
  %s2 = inlined_call_operand.hbm [shape: bf16[128,128], index: 2, kind: input, shape index: {}]
  %s3 = inlined_call_operand.vmem [shape: f32[8,128], index: 3, kind: input, shape index: {}]
  %s4 = inlined_call_operand.vmem [shape: f32[8,1], index: 4, kind: output, shape index: {}]
  %s5 = sld [smem:[#allocation0]]
  $region46: #{tpu_custom_call.1} parent=0
    _
  %s7 = ssub.s32 1, %s5
  %s8 = scalar_select 0, %s7, %s5
  $region1: #{tpu_custom_call.1} parent=0
    #allocation3 [shape = 'u8[131072]{0}', space=vmem, size = 0x20000, scoped, tag = 'input window, operand 0, single buffered']
    #allocation4 [shape = 's32[1]{0}', space=sflag, size = 0x4, scoped, tag = 'scoped memory for tpu_custom_call.1']
    #allocation5 [shape = 'u8[1048576]{0}', space=vmem, size = 0x100000, scoped, tag = 'input window, operand 1, single buffered']
    #allocation6 [shape = 's32[1]{0}', space=sflag, size = 0x4, scoped, tag = 'scoped memory for tpu_custom_call.1']
    #allocation7 [shape = 'u8[32768]{0}', space=vmem, size = 0x8000, scoped, tag = 'input window, operand 2, single buffered']
    %9 = vsyncpa [#allocation4], 0
    %10 = vsyncpa [#allocation6], 0
    // Predicated region
    $region2: #{tpu_custom_call.1} parent=1 // pred_check
      _
    $region3: #{tpu_custom_call.1} parent=1 // pred_check_branch
      %12 = sbr.rel (0) target = $region5
    $region4: #{tpu_custom_call.1} parent=1 // pred_region
      %s14 = ssub.s32 4096, 4096
      %15 = vsyncadd [#allocation4], %s14
      %s17 = sshll.u32 [#allocation3], 4
      %s18 = int_to_ptr.vmem [resolvable:$true] %s17
      %20 = dma.hbm_to_vmem [thread:$0]  %s0, 4096, %s18, [#allocation4]
    $region5: #{tpu_custom_call.1} parent=1 // pred_fallthru
      _
    // Predicated region
    $region6: #{tpu_custom_call.1} parent=1 // pred_check
      _
    $region7: #{tpu_custom_call.1} parent=1 // pred_check_branch
      %22 = sbr.rel (0) target = $region9
    $region8: #{tpu_custom_call.1} parent=1 // pred_region
      %s24 = ssub.s32 32768, 32768
      %25 = vsyncadd [#allocation6], %s24
      %s26 = sshll.u32 [#allocation5], 4
      %s27 = int_to_ptr.vmem [resolvable:$true] %s26
      %32 = dma.hbm_to_vmem [thread:$0]  %s1, 32768, %s27, [#allocation6], 64, 64, 4
    $region9: #{tpu_custom_call.1} parent=1 // pred_fallthru
      _
    // Predicated region
    $region10: #{tpu_custom_call.1} parent=1 // pred_check
      _
    $region11: #{tpu_custom_call.1} parent=1 // pred_check_branch
      %34 = sbr.rel (0) target = $region13
    $region12: #{tpu_custom_call.1} parent=1 // pred_region
      %s36 = ssub.s32 1024, 1024
      %37 = vsyncadd [#allocation6], %s36
      %s38 = sshll.u32 [#allocation7], 4
      %s39 = int_to_ptr.vmem [resolvable:$true] %s38
      %44 = dma.hbm_to_vmem [thread:$0]  %s2, 1024, %s39, [#allocation6], 64, 64, 4
    $region13: #{tpu_custom_call.1} parent=1 // pred_fallthru
      _
    // Predicated region
    $region14: #{tpu_custom_call.1} parent=1 // pred_check
      _
    $region15: #{tpu_custom_call.1} parent=1 // pred_check_branch
      %46 = sbr.rel (0) target = $region17
    $region16: #{tpu_custom_call.1} parent=1 // pred_region
      _
    $region17: #{tpu_custom_call.1} parent=1 // pred_fallthru
      _
    // Predicated region
    $region18: #{tpu_custom_call.1} parent=1 // pred_check
      _
    $region19: #{tpu_custom_call.1} parent=1 // pred_check_branch
      %48 = sbr.rel (0) target = $region21
    $region20: #{tpu_custom_call.1} parent=1 // pred_region
      %49 = dma.done [#allocation4], 4096
    $region21: #{tpu_custom_call.1} parent=1 // pred_fallthru
      _
    // Predicated region
    $region22: #{tpu_custom_call.1} parent=1 // pred_check
      _
    $region23: #{tpu_custom_call.1} parent=1 // pred_check_branch
      %51 = sbr.rel (0) target = $region25
    $region24: #{tpu_custom_call.1} parent=1 // pred_region
      %52 = dma.done [#allocation6], 32768
    $region25: #{tpu_custom_call.1} parent=1 // pred_fallthru
      _
    // Predicated region
    $region26: #{tpu_custom_call.1} parent=1 // pred_check
      _
    $region27: #{tpu_custom_call.1} parent=1 // pred_check_branch
      %54 = sbr.rel (0) target = $region29
    $region28: #{tpu_custom_call.1} parent=1 // pred_region
      %55 = dma.done [#allocation6], 1024
    $region29: #{tpu_custom_call.1} parent=1 // pred_fallthru
      _
    %p57 = scmp.eq.s32.totalorder 0, 0
    // Predicated region
    $region30: #{tpu_custom_call.1} parent=1 // pred_check
      %p58 = pneg %p57
    $region31: #{tpu_custom_call.1} parent=1 // pred_check_branch
      %60 = sbr.rel (%p58) target = $region33
    $region32: #{tpu_custom_call.1} parent=1 // pred_region
      %61 = vst [vmem:[#allocation2] sm:$0xff] 0.0
    $region33: #{tpu_custom_call.1} parent=1 // pred_fallthru
      _
    %v62 = vld [vmem:[#allocation2] sm:$0xff]
    %v63 = vld [vmem:[#allocation3] sm:$0xff]
    %v64 = vld [vmem:[#allocation3 + $0x8] sm:$0xff]
    %v65 = vld [vmem:[#allocation3 + $0x10] sm:$0xff]
    %v66 = vld [vmem:[#allocation3 + $0x18] sm:$0xff]
    %v67 = vld [vmem:[#allocation3 + $0x20] sm:$0xff]
    %v68 = vld [vmem:[#allocation3 + $0x28] sm:$0xff]
    %v69 = vld [vmem:[#allocation3 + $0x30] sm:$0xff]
    %v70 = vld [vmem:[#allocation3 + $0x38] sm:$0xff]
    %v71 = vld [vmem:[#allocation3 + $0x40] sm:$0xff]
    %v72 = vld [vmem:[#allocation3 + $0x48] sm:$0xff]
    %v73 = vld [vmem:[#allocation3 + $0x50] sm:$0xff]
    %v74 = vld [vmem:[#allocation3 + $0x58] sm:$0xff]
    %v75 = vld [vmem:[#allocation3 + $0x60] sm:$0xff]
    %v76 = vld [vmem:[#allocation3 + $0x68] sm:$0xff]
    %v77 = vld [vmem:[#allocation3 + $0x70] sm:$0xff]
    %v78 = vld [vmem:[#allocation3 + $0x78] sm:$0xff]
    %v79 = vld [vmem:[#allocation3 + $0x80] sm:$0xff]
    %v80 = vld [vmem:[#allocation3 + $0x88] sm:$0xff]
    %v81 = vld [vmem:[#allocation3 + $0x90] sm:$0xff]
    %v82 = vld [vmem:[#allocation3 + $0x98] sm:$0xff]
    %v83 = vld [vmem:[#allocation3 + $0xa0] sm:$0xff]
    %v84 = vld [vmem:[#allocation3 + $0xa8] sm:$0xff]
    %v85 = vld [vmem:[#allocation3 + $0xb0] sm:$0xff]
    %v86 = vld [vmem:[#allocation3 + $0xb8] sm:$0xff]
    %v87 = vld [vmem:[#allocation3 + $0xc0] sm:$0xff]
    %v88 = vld [vmem:[#allocation3 + $0xc8] sm:$0xff]
    %v89 = vld [vmem:[#allocation3 + $0xd0] sm:$0xff]
    %v90 = vld [vmem:[#allocation3 + $0xd8] sm:$0xff]
    %v91 = vld [vmem:[#allocation3 + $0xe0] sm:$0xff]
    %v92 = vld [vmem:[#allocation3 + $0xe8] sm:$0xff]
    %v93 = vld [vmem:[#allocation3 + $0xf0] sm:$0xff]
    %v94 = vld [vmem:[#allocation3 + $0xf8] sm:$0xff]
    %v95 = vpack.c.bf16 %v63, %v63
    %v96 = vpack.c.bf16 %v64, %v64
    %v97 = vpack.c.bf16 %v65, %v65
    %v98 = vpack.c.bf16 %v66, %v66
    %v99 = vpack.c.bf16 %v67, %v67
    %v100 = vpack.c.bf16 %v68, %v68
    %v101 = vpack.c.bf16 %v69, %v69
    %v102 = vpack.c.bf16 %v70, %v70
    %v103 = vpack.c.bf16 %v71, %v71
    %v104 = vpack.c.bf16 %v72, %v72
    %v105 = vpack.c.bf16 %v73, %v73
    %v106 = vpack.c.bf16 %v74, %v74
    %v107 = vpack.c.bf16 %v75, %v75
    %v108 = vpack.c.bf16 %v76, %v76
    %v109 = vpack.c.bf16 %v77, %v77
    %v110 = vpack.c.bf16 %v78, %v78
    %v111 = vpack.c.bf16 %v79, %v79
    %v112 = vpack.c.bf16 %v80, %v80
    %v113 = vpack.c.bf16 %v81, %v81
    %v114 = vpack.c.bf16 %v82, %v82
    %v115 = vpack.c.bf16 %v83, %v83
    %v116 = vpack.c.bf16 %v84, %v84
    %v117 = vpack.c.bf16 %v85, %v85
    %v118 = vpack.c.bf16 %v86, %v86
    %v119 = vpack.c.bf16 %v87, %v87
    %v120 = vpack.c.bf16 %v88, %v88
    %v121 = vpack.c.bf16 %v89, %v89
    %v122 = vpack.c.bf16 %v90, %v90
    %v123 = vpack.c.bf16 %v91, %v91
    %v124 = vpack.c.bf16 %v92, %v92
    %v125 = vpack.c.bf16 %v93, %v93
    %v126 = vpack.c.bf16 %v94, %v94
    %v127 = vld [vmem:[#allocation5] sm:$0xf]
    %v128 = vld [vmem:[#allocation5 + $0x4] sm:$0xf]
    %v129 = vld [vmem:[#allocation5 + $0x8] sm:$0xf]
    %v130 = vld [vmem:[#allocation5 + $0xc] sm:$0xf]
    %v131 = vld [vmem:[#allocation5 + $0x10] sm:$0xf]
    %v132 = vld [vmem:[#allocation5 + $0x14] sm:$0xf]
    %v133 = vld [vmem:[#allocation5 + $0x18] sm:$0xf]
    %v134 = vld [vmem:[#allocation5 + $0x1c] sm:$0xf]
    %v135 = vld [vmem:[#allocation5 + $0x20] sm:$0xf]
    %v136 = vld [vmem:[#allocation5 + $0x24] sm:$0xf]
    %v137 = vld [vmem:[#allocation5 + $0x28] sm:$0xf]
    %v138 = vld [vmem:[#allocation5 + $0x2c] sm:$0xf]
    %v139 = vld [vmem:[#allocation5 + $0x30] sm:$0xf]
    %v140 = vld [vmem:[#allocation5 + $0x34] sm:$0xf]
    %v141 = vld [vmem:[#allocation5 + $0x38] sm:$0xf]
    %v142 = vld [vmem:[#allocation5 + $0x3c] sm:$0xf]
    %v143 = vld [vmem:[#allocation5 + $0x40] sm:$0xf]
    %v144 = vld [vmem:[#allocation5 + $0x44] sm:$0xf]
    %v145 = vld [vmem:[#allocation5 + $0x48] sm:$0xf]
    %v146 = vld [vmem:[#allocation5 + $0x4c] sm:$0xf]
    %v147 = vld [vmem:[#allocation5 + $0x50] sm:$0xf]
    %v148 = vld [vmem:[#allocation5 + $0x54] sm:$0xf]
    %v149 = vld [vmem:[#allocation5 + $0x58] sm:$0xf]
    %v150 = vld [vmem:[#allocation5 + $0x5c] sm:$0xf]
    %v151 = vld [vmem:[#allocation5 + $0x60] sm:$0xf]
    %v152 = vld [vmem:[#allocation5 + $0x64] sm:$0xf]
    %v153 = vld [vmem:[#allocation5 + $0x68] sm:$0xf]
    %v154 = vld [vmem:[#allocation5 + $0x6c] sm:$0xf]
    %v155 = vld [vmem:[#allocation5 + $0x70] sm:$0xf]
    %v156 = vld [vmem:[#allocation5 + $0x74] sm:$0xf]
    %v157 = vld [vmem:[#allocation5 + $0x78] sm:$0xf]
    %v158 = vld [vmem:[#allocation5 + $0x7c] sm:$0xf]
    %v159 = vld [vmem:[#allocation5 + $0x80] sm:$0xf]
    %v160 = vld [vmem:[#allocation5 + $0x84] sm:$0xf]
    %v161 = vld [vmem:[#allocation5 + $0x88] sm:$0xf]
    %v162 = vld [vmem:[#allocation5 + $0x8c] sm:$0xf]
    %v163 = vld [vmem:[#allocation5 + $0x90] sm:$0xf]
    %v164 = vld [vmem:[#allocation5 + $0x94] sm:$0xf]
    %v165 = vld [vmem:[#allocation5 + $0x98] sm:$0xf]
    %v166 = vld [vmem:[#allocation5 + $0x9c] sm:$0xf]
    %v167 = vld [vmem:[#allocation5 + $0xa0] sm:$0xf]
    %v168 = vld [vmem:[#allocation5 + $0xa4] sm:$0xf]
    %v169 = vld [vmem:[#allocation5 + $0xa8] sm:$0xf]
    %v170 = vld [vmem:[#allocation5 + $0xac] sm:$0xf]
    %v171 = vld [vmem:[#allocation5 + $0xb0] sm:$0xf]
    %v172 = vld [vmem:[#allocation5 + $0xb4] sm:$0xf]
    %v173 = vld [vmem:[#allocation5 + $0xb8] sm:$0xf]
    %v174 = vld [vmem:[#allocation5 + $0xbc] sm:$0xf]
    %v175 = vld [vmem:[#allocation5 + $0xc0] sm:$0xf]
    %v176 = vld [vmem:[#allocation5 + $0xc4] sm:$0xf]
    %v177 = vld [vmem:[#allocation5 + $0xc8] sm:$0xf]
    %v178 = vld [vmem:[#allocation5 + $0xcc] sm:$0xf]
    %v179 = vld [vmem:[#allocation5 + $0xd0] sm:$0xf]
    %v180 = vld [vmem:[#allocation5 + $0xd4] sm:$0xf]
    %v181 = vld [vmem:[#allocation5 + $0xd8] sm:$0xf]
    %v182 = vld [vmem:[#allocation5 + $0xdc] sm:$0xf]
    %v183 = vld [vmem:[#allocation5 + $0xe0] sm:$0xf]
    %v184 = vld [vmem:[#allocation5 + $0xe4] sm:$0xf]
    %v185 = vld [vmem:[#allocation5 + $0xe8] sm:$0xf]
    %v186 = vld [vmem:[#allocation5 + $0xec] sm:$0xf]
    %v187 = vld [vmem:[#allocation5 + $0xf0] sm:$0xf]
    %v188 = vld [vmem:[#allocation5 + $0xf4] sm:$0xf]
    %v189 = vld [vmem:[#allocation5 + $0xf8] sm:$0xf]
    %v190 = vld [vmem:[#allocation5 + $0xfc] sm:$0xf]
    %v191 = vld [vmem:[#allocation5 + $0x100] sm:$0xf]
    %v192 = vld [vmem:[#allocation5 + $0x104] sm:$0xf]
    %v193 = vld [vmem:[#allocation5 + $0x108] sm:$0xf]
    %v194 = vld [vmem:[#allocation5 + $0x10c] sm:$0xf]
    %v195 = vld [vmem:[#allocation5 + $0x110] sm:$0xf]
    %v196 = vld [vmem:[#allocation5 + $0x114] sm:$0xf]
    %v197 = vld [vmem:[#allocation5 + $0x118] sm:$0xf]
    %v198 = vld [vmem:[#allocation5 + $0x11c] sm:$0xf]
    %v199 = vld [vmem:[#allocation5 + $0x120] sm:$0xf]
    %v200 = vld [vmem:[#allocation5 + $0x124] sm:$0xf]
    %v201 = vld [vmem:[#allocation5 + $0x128] sm:$0xf]
    %v202 = vld [vmem:[#allocation5 + $0x12c] sm:$0xf]
    %v203 = vld [vmem:[#allocation5 + $0x130] sm:$0xf]
    %v204 = vld [vmem:[#allocation5 + $0x134] sm:$0xf]
    %v205 = vld [vmem:[#allocation5 + $0x138] sm:$0xf]
    %v206 = vld [vmem:[#allocation5 + $0x13c] sm:$0xf]
    %v207 = vld [vmem:[#allocation5 + $0x140] sm:$0xf]
    %v208 = vld [vmem:[#allocation5 + $0x144] sm:$0xf]
    %v209 = vld [vmem:[#allocation5 + $0x148] sm:$0xf]
    %v210 = vld [vmem:[#allocation5 + $0x14c] sm:$0xf]
    %v211 = vld [vmem:[#allocation5 + $0x150] sm:$0xf]
    %v212 = vld [vmem:[#allocation5 + $0x154] sm:$0xf]
    %v213 = vld [vmem:[#allocation5 + $0x158] sm:$0xf]
    %v214 = vld [vmem:[#allocation5 + $0x15c] sm:$0xf]
    %v215 = vld [vmem:[#allocation5 + $0x160] sm:$0xf]
    %v216 = vld [vmem:[#allocation5 + $0x164] sm:$0xf]
    %v217 = vld [vmem:[#allocation5 + $0x168] sm:$0xf]
    %v218 = vld [vmem:[#allocation5 + $0x16c] sm:$0xf]
    %v219 = vld [vmem:[#allocation5 + $0x170] sm:$0xf]
    %v220 = vld [vmem:[#allocation5 + $0x174] sm:$0xf]
    %v221 = vld [vmem:[#allocation5 + $0x178] sm:$0xf]
    %v222 = vld [vmem:[#allocation5 + $0x17c] sm:$0xf]
    %v223 = vld [vmem:[#allocation5 + $0x180] sm:$0xf]
    %v224 = vld [vmem:[#allocation5 + $0x184] sm:$0xf]
    %v225 = vld [vmem:[#allocation5 + $0x188] sm:$0xf]
    %v226 = vld [vmem:[#allocation5 + $0x18c] sm:$0xf]
    %v227 = vld [vmem:[#allocation5 + $0x190] sm:$0xf]
    %v228 = vld [vmem:[#allocation5 + $0x194] sm:$0xf]
    %v229 = vld [vmem:[#allocation5 + $0x198] sm:$0xf]
    %v230 = vld [vmem:[#allocation5 + $0x19c] sm:$0xf]
    %v231 = vld [vmem:[#allocation5 + $0x1a0] sm:$0xf]
    %v232 = vld [vmem:[#allocation5 + $0x1a4] sm:$0xf]
    %v233 = vld [vmem:[#allocation5 + $0x1a8] sm:$0xf]
    %v234 = vld [vmem:[#allocation5 + $0x1ac] sm:$0xf]
    %v235 = vld [vmem:[#allocation5 + $0x1b0] sm:$0xf]
    %v236 = vld [vmem:[#allocation5 + $0x1b4] sm:$0xf]
    %v237 = vld [vmem:[#allocation5 + $0x1b8] sm:$0xf]
    %v238 = vld [vmem:[#allocation5 + $0x1bc] sm:$0xf]
    %v239 = vld [vmem:[#allocation5 + $0x1c0] sm:$0xf]
    %v240 = vld [vmem:[#allocation5 + $0x1c4] sm:$0xf]
    %v241 = vld [vmem:[#allocation5 + $0x1c8] sm:$0xf]
    %v242 = vld [vmem:[#allocation5 + $0x1cc] sm:$0xf]
    %v243 = vld [vmem:[#allocation5 + $0x1d0] sm:$0xf]
    %v244 = vld [vmem:[#allocation5 + $0x1d4] sm:$0xf]
    %v245 = vld [vmem:[#allocation5 + $0x1d8] sm:$0xf]
    %v246 = vld [vmem:[#allocation5 + $0x1dc] sm:$0xf]
    %v247 = vld [vmem:[#allocation5 + $0x1e0] sm:$0xf]
    %v248 = vld [vmem:[#allocation5 + $0x1e4] sm:$0xf]
    %v249 = vld [vmem:[#allocation5 + $0x1e8] sm:$0xf]
    %v250 = vld [vmem:[#allocation5 + $0x1ec] sm:$0xf]
    %v251 = vld [vmem:[#allocation5 + $0x1f0] sm:$0xf]
    %v252 = vld [vmem:[#allocation5 + $0x1f4] sm:$0xf]
    %v253 = vld [vmem:[#allocation5 + $0x1f8] sm:$0xf]
    %v254 = vld [vmem:[#allocation5 + $0x1fc] sm:$0xf]
    %v255 = vld [vmem:[#allocation5 + $0x200] sm:$0xf]
    %v256 = vld [vmem:[#allocation5 + $0x204] sm:$0xf]
    %v257 = vld [vmem:[#allocation5 + $0x208] sm:$0xf]
    %v258 = vld [vmem:[#allocation5 + $0x20c] sm:$0xf]
    %v259 = vld [vmem:[#allocation5 + $0x210] sm:$0xf]
    %v260 = vld [vmem:[#allocation5 + $0x214] sm:$0xf]
    %v261 = vld [vmem:[#allocation5 + $0x218] sm:$0xf]
    %v262 = vld [vmem:[#allocation5 + $0x21c] sm:$0xf]
    %v263 = vld [vmem:[#allocation5 + $0x220] sm:$0xf]
    %v264 = vld [vmem:[#allocation5 + $0x224] sm:$0xf]
    %v265 = vld [vmem:[#allocation5 + $0x228] sm:$0xf]
    %v266 = vld [vmem:[#allocation5 + $0x22c] sm:$0xf]
    %v267 = vld [vmem:[#allocation5 + $0x230] sm:$0xf]
    %v268 = vld [vmem:[#allocation5 + $0x234] sm:$0xf]
    %v269 = vld [vmem:[#allocation5 + $0x238] sm:$0xf]
    %v270 = vld [vmem:[#allocation5 + $0x23c] sm:$0xf]
    %v271 = vld [vmem:[#allocation5 + $0x240] sm:$0xf]
    %v272 = vld [vmem:[#allocation5 + $0x244] sm:$0xf]
    %v273 = vld [vmem:[#allocation5 + $0x248] sm:$0xf]
    %v274 = vld [vmem:[#allocation5 + $0x24c] sm:$0xf]
    %v275 = vld [vmem:[#allocation5 + $0x250] sm:$0xf]
    %v276 = vld [vmem:[#allocation5 + $0x254] sm:$0xf]
    %v277 = vld [vmem:[#allocation5 + $0x258] sm:$0xf]
    %v278 = vld [vmem:[#allocation5 + $0x25c] sm:$0xf]
    %v279 = vld [vmem:[#allocation5 + $0x260] sm:$0xf]
    %v280 = vld [vmem:[#allocation5 + $0x264] sm:$0xf]
    %v281 = vld [vmem:[#allocation5 + $0x268] sm:$0xf]
    %v282 = vld [vmem:[#allocation5 + $0x26c] sm:$0xf]
    %v283 = vld [vmem:[#allocation5 + $0x270] sm:$0xf]
    %v284 = vld [vmem:[#allocation5 + $0x274] sm:$0xf]
    %v285 = vld [vmem:[#allocation5 + $0x278] sm:$0xf]
    %v286 = vld [vmem:[#allocation5 + $0x27c] sm:$0xf]
    %v287 = vld [vmem:[#allocation5 + $0x280] sm:$0xf]
    %v288 = vld [vmem:[#allocation5 + $0x284] sm:$0xf]
    %v289 = vld [vmem:[#allocation5 + $0x288] sm:$0xf]
    %v290 = vld [vmem:[#allocation5 + $0x28c] sm:$0xf]
    %v291 = vld [vmem:[#allocation5 + $0x290] sm:$0xf]
    %v292 = vld [vmem:[#allocation5 + $0x294] sm:$0xf]
    %v293 = vld [vmem:[#allocation5 + $0x298] sm:$0xf]
    %v294 = vld [vmem:[#allocation5 + $0x29c] sm:$0xf]
    %v295 = vld [vmem:[#allocation5 + $0x2a0] sm:$0xf]
    %v296 = vld [vmem:[#allocation5 + $0x2a4] sm:$0xf]
    %v297 = vld [vmem:[#allocation5 + $0x2a8] sm:$0xf]
    %v298 = vld [vmem:[#allocation5 + $0x2ac] sm:$0xf]
    %v299 = vld [vmem:[#allocation5 + $0x2b0] sm:$0xf]
    %v300 = vld [vmem:[#allocation5 + $0x2b4] sm:$0xf]
    %v301 = vld [vmem:[#allocation5 + $0x2b8] sm:$0xf]
    %v302 = vld [vmem:[#allocation5 + $0x2bc] sm:$0xf]
    %v303 = vld [vmem:[#allocation5 + $0x2c0] sm:$0xf]
    %v304 = vld [vmem:[#allocation5 + $0x2c4] sm:$0xf]
    %v305 = vld [vmem:[#allocation5 + $0x2c8] sm:$0xf]
    %v306 = vld [vmem:[#allocation5 + $0x2cc] sm:$0xf]
    %v307 = vld [vmem:[#allocation5 + $0x2d0] sm:$0xf]
    %v308 = vld [vmem:[#allocation5 + $0x2d4] sm:$0xf]
    %v309 = vld [vmem:[#allocation5 + $0x2d8] sm:$0xf]
    %v310 = vld [vmem:[#allocation5 + $0x2dc] sm:$0xf]
    %v311 = vld [vmem:[#allocation5 + $0x2e0] sm:$0xf]
    %v312 = vld [vmem:[#allocation5 + $0x2e4] sm:$0xf]
    %v313 = vld [vmem:[#allocation5 + $0x2e8] sm:$0xf]
    %v314 = vld [vmem:[#allocation5 + $0x2ec] sm:$0xf]
    %v315 = vld [vmem:[#allocation5 + $0x2f0] sm:$0xf]
    %v316 = vld [vmem:[#allocation5 + $0x2f4] sm:$0xf]
    %v317 = vld [vmem:[#allocation5 + $0x2f8] sm:$0xf]
    %v318 = vld [vmem:[#allocation5 + $0x2fc] sm:$0xf]
    %v319 = vld [vmem:[#allocation5 + $0x300] sm:$0xf]
    %v320 = vld [vmem:[#allocation5 + $0x304] sm:$0xf]
    %v321 = vld [vmem:[#allocation5 + $0x308] sm:$0xf]
    %v322 = vld [vmem:[#allocation5 + $0x30c] sm:$0xf]
    %v323 = vld [vmem:[#allocation5 + $0x310] sm:$0xf]
    %v324 = vld [vmem:[#allocation5 + $0x314] sm:$0xf]
    %v325 = vld [vmem:[#allocation5 + $0x318] sm:$0xf]
    %v326 = vld [vmem:[#allocation5 + $0x31c] sm:$0xf]
    %v327 = vld [vmem:[#allocation5 + $0x320] sm:$0xf]
    %v328 = vld [vmem:[#allocation5 + $0x324] sm:$0xf]
    %v329 = vld [vmem:[#allocation5 + $0x328] sm:$0xf]
    %v330 = vld [vmem:[#allocation5 + $0x32c] sm:$0xf]
    %v331 = vld [vmem:[#allocation5 + $0x330] sm:$0xf]
    %v332 = vld [vmem:[#allocation5 + $0x334] sm:$0xf]
    %v333 = vld [vmem:[#allocation5 + $0x338] sm:$0xf]
    %v334 = vld [vmem:[#allocation5 + $0x33c] sm:$0xf]
    %v335 = vld [vmem:[#allocation5 + $0x340] sm:$0xf]
    %v336 = vld [vmem:[#allocation5 + $0x344] sm:$0xf]
    %v337 = vld [vmem:[#allocation5 + $0x348] sm:$0xf]
    %v338 = vld [vmem:[#allocation5 + $0x34c] sm:$0xf]
    %v339 = vld [vmem:[#allocation5 + $0x350] sm:$0xf]
    %v340 = vld [vmem:[#allocation5 + $0x354] sm:$0xf]
    %v341 = vld [vmem:[#allocation5 + $0x358] sm:$0xf]
    %v342 = vld [vmem:[#allocation5 + $0x35c] sm:$0xf]
    %v343 = vld [vmem:[#allocation5 + $0x360] sm:$0xf]
    %v344 = vld [vmem:[#allocation5 + $0x364] sm:$0xf]
    %v345 = vld [vmem:[#allocation5 + $0x368] sm:$0xf]
    %v346 = vld [vmem:[#allocation5 + $0x36c] sm:$0xf]
    %v347 = vld [vmem:[#allocation5 + $0x370] sm:$0xf]
    %v348 = vld [vmem:[#allocation5 + $0x374] sm:$0xf]
    %v349 = vld [vmem:[#allocation5 + $0x378] sm:$0xf]
    %v350 = vld [vmem:[#allocation5 + $0x37c] sm:$0xf]
    %v351 = vld [vmem:[#allocation5 + $0x380] sm:$0xf]
    %v352 = vld [vmem:[#allocation5 + $0x384] sm:$0xf]
    %v353 = vld [vmem:[#allocation5 + $0x388] sm:$0xf]
    %v354 = vld [vmem:[#allocation5 + $0x38c] sm:$0xf]
    %v355 = vld [vmem:[#allocation5 + $0x390] sm:$0xf]
    %v356 = vld [vmem:[#allocation5 + $0x394] sm:$0xf]
    %v357 = vld [vmem:[#allocation5 + $0x398] sm:$0xf]
    %v358 = vld [vmem:[#allocation5 + $0x39c] sm:$0xf]
    %v359 = vld [vmem:[#allocation5 + $0x3a0] sm:$0xf]
    %v360 = vld [vmem:[#allocation5 + $0x3a4] sm:$0xf]
    %v361 = vld [vmem:[#allocation5 + $0x3a8] sm:$0xf]
    %v362 = vld [vmem:[#allocation5 + $0x3ac] sm:$0xf]
    %v363 = vld [vmem:[#allocation5 + $0x3b0] sm:$0xf]
    %v364 = vld [vmem:[#allocation5 + $0x3b4] sm:$0xf]
    %v365 = vld [vmem:[#allocation5 + $0x3b8] sm:$0xf]
    %v366 = vld [vmem:[#allocation5 + $0x3bc] sm:$0xf]
    %v367 = vld [vmem:[#allocation5 + $0x3c0] sm:$0xf]
    %v368 = vld [vmem:[#allocation5 + $0x3c4] sm:$0xf]
    %v369 = vld [vmem:[#allocation5 + $0x3c8] sm:$0xf]
    %v370 = vld [vmem:[#allocation5 + $0x3cc] sm:$0xf]
    %v371 = vld [vmem:[#allocation5 + $0x3d0] sm:$0xf]
    %v372 = vld [vmem:[#allocation5 + $0x3d4] sm:$0xf]
    %v373 = vld [vmem:[#allocation5 + $0x3d8] sm:$0xf]
    %v374 = vld [vmem:[#allocation5 + $0x3dc] sm:$0xf]
    %v375 = vld [vmem:[#allocation5 + $0x3e0] sm:$0xf]
    %v376 = vld [vmem:[#allocation5 + $0x3e4] sm:$0xf]
    %v377 = vld [vmem:[#allocation5 + $0x3e8] sm:$0xf]
    %v378 = vld [vmem:[#allocation5 + $0x3ec] sm:$0xf]
    %v379 = vld [vmem:[#allocation5 + $0x3f0] sm:$0xf]
    %v380 = vld [vmem:[#allocation5 + $0x3f4] sm:$0xf]
    %v381 = vld [vmem:[#allocation5 + $0x3f8] sm:$0xf]
    %v382 = vld [vmem:[#allocation5 + $0x3fc] sm:$0xf]
    %v383 = vld [vmem:[#allocation5 + $0x400] sm:$0xf]
    %v384 = vld [vmem:[#allocation5 + $0x404] sm:$0xf]
    %v385 = vld [vmem:[#allocation5 + $0x408] sm:$0xf]
    %v386 = vld [vmem:[#allocation5 + $0x40c] sm:$0xf]
    %v387 = vld [vmem:[#allocation5 + $0x410] sm:$0xf]
    %v388 = vld [vmem:[#allocation5 + $0x414] sm:$0xf]
    %v389 = vld [vmem:[#allocation5 + $0x418] sm:$0xf]
    %v390 = vld [vmem:[#allocation5 + $0x41c] sm:$0xf]
    %v391 = vld [vmem:[#allocation5 + $0x420] sm:$0xf]
    %v392 = vld [vmem:[#allocation5 + $0x424] sm:$0xf]
    %v393 = vld [vmem:[#allocation5 + $0x428] sm:$0xf]
    %v394 = vld [vmem:[#allocation5 + $0x42c] sm:$0xf]
    %v395 = vld [vmem:[#allocation5 + $0x430] sm:$0xf]
    %v396 = vld [vmem:[#allocation5 + $0x434] sm:$0xf]
    %v397 = vld [vmem:[#allocation5 + $0x438] sm:$0xf]
    %v398 = vld [vmem:[#allocation5 + $0x43c] sm:$0xf]
    %v399 = vld [vmem:[#allocation5 + $0x440] sm:$0xf]
    %v400 = vld [vmem:[#allocation5 + $0x444] sm:$0xf]
    %v401 = vld [vmem:[#allocation5 + $0x448] sm:$0xf]
    %v402 = vld [vmem:[#allocation5 + $0x44c] sm:$0xf]
    %v403 = vld [vmem:[#allocation5 + $0x450] sm:$0xf]
    %v404 = vld [vmem:[#allocation5 + $0x454] sm:$0xf]
    %v405 = vld [vmem:[#allocation5 + $0x458] sm:$0xf]
    %v406 = vld [vmem:[#allocation5 + $0x45c] sm:$0xf]
    %v407 = vld [vmem:[#allocation5 + $0x460] sm:$0xf]
    %v408 = vld [vmem:[#allocation5 + $0x464] sm:$0xf]
    %v409 = vld [vmem:[#allocation5 + $0x468] sm:$0xf]
    %v410 = vld [vmem:[#allocation5 + $0x46c] sm:$0xf]
    %v411 = vld [vmem:[#allocation5 + $0x470] sm:$0xf]
    %v412 = vld [vmem:[#allocation5 + $0x474] sm:$0xf]
    %v413 = vld [vmem:[#allocation5 + $0x478] sm:$0xf]
    %v414 = vld [vmem:[#allocation5 + $0x47c] sm:$0xf]
    %v415 = vld [vmem:[#allocation5 + $0x480] sm:$0xf]
    %v416 = vld [vmem:[#allocation5 + $0x484] sm:$0xf]
    %v417 = vld [vmem:[#allocation5 + $0x488] sm:$0xf]
    %v418 = vld [vmem:[#allocation5 + $0x48c] sm:$0xf]
    %v419 = vld [vmem:[#allocation5 + $0x490] sm:$0xf]
    %v420 = vld [vmem:[#allocation5 + $0x494] sm:$0xf]
    %v421 = vld [vmem:[#allocation5 + $0x498] sm:$0xf]
    %v422 = vld [vmem:[#allocation5 + $0x49c] sm:$0xf]
    %v423 = vld [vmem:[#allocation5 + $0x4a0] sm:$0xf]
    %v424 = vld [vmem:[#allocation5 + $0x4a4] sm:$0xf]
    %v425 = vld [vmem:[#allocation5 + $0x4a8] sm:$0xf]
    %v426 = vld [vmem:[#allocation5 + $0x4ac] sm:$0xf]
    %v427 = vld [vmem:[#allocation5 + $0x4b0] sm:$0xf]
    %v428 = vld [vmem:[#allocation5 + $0x4b4] sm:$0xf]
    %v429 = vld [vmem:[#allocation5 + $0x4b8] sm:$0xf]
    %v430 = vld [vmem:[#allocation5 + $0x4bc] sm:$0xf]
    %v431 = vld [vmem:[#allocation5 + $0x4c0] sm:$0xf]
    %v432 = vld [vmem:[#allocation5 + $0x4c4] sm:$0xf]
    %v433 = vld [vmem:[#allocation5 + $0x4c8] sm:$0xf]
    %v434 = vld [vmem:[#allocation5 + $0x4cc] sm:$0xf]
    %v435 = vld [vmem:[#allocation5 + $0x4d0] sm:$0xf]
    %v436 = vld [vmem:[#allocation5 + $0x4d4] sm:$0xf]
    %v437 = vld [vmem:[#allocation5 + $0x4d8] sm:$0xf]
    %v438 = vld [vmem:[#allocation5 + $0x4dc] sm:$0xf]
    %v439 = vld [vmem:[#allocation5 + $0x4e0] sm:$0xf]
    %v440 = vld [vmem:[#allocation5 + $0x4e4] sm:$0xf]
    %v441 = vld [vmem:[#allocation5 + $0x4e8] sm:$0xf]
    %v442 = vld [vmem:[#allocation5 + $0x4ec] sm:$0xf]
    %v443 = vld [vmem:[#allocation5 + $0x4f0] sm:$0xf]
    %v444 = vld [vmem:[#allocation5 + $0x4f4] sm:$0xf]
    %v445 = vld [vmem:[#allocation5 + $0x4f8] sm:$0xf]
    %v446 = vld [vmem:[#allocation5 + $0x4fc] sm:$0xf]
    %v447 = vld [vmem:[#allocation5 + $0x500] sm:$0xf]
    %v448 = vld [vmem:[#allocation5 + $0x504] sm:$0xf]
    %v449 = vld [vmem:[#allocation5 + $0x508] sm:$0xf]
    %v450 = vld [vmem:[#allocation5 + $0x50c] sm:$0xf]
    %v451 = vld [vmem:[#allocation5 + $0x510] sm:$0xf]
    %v452 = vld [vmem:[#allocation5 + $0x514] sm:$0xf]
    %v453 = vld [vmem:[#allocation5 + $0x518] sm:$0xf]
    %v454 = vld [vmem:[#allocation5 + $0x51c] sm:$0xf]
    %v455 = vld [vmem:[#allocation5 + $0x520] sm:$0xf]
    %v456 = vld [vmem:[#allocation5 + $0x524] sm:$0xf]
    %v457 = vld [vmem:[#allocation5 + $0x528] sm:$0xf]
    %v458 = vld [vmem:[#allocation5 + $0x52c] sm:$0xf]
    %v459 = vld [vmem:[#allocation5 + $0x530] sm:$0xf]
    %v460 = vld [vmem:[#allocation5 + $0x534] sm:$0xf]
    %v461 = vld [vmem:[#allocation5 + $0x538] sm:$0xf]
    %v462 = vld [vmem:[#allocation5 + $0x53c] sm:$0xf]
    %v463 = vld [vmem:[#allocation5 + $0x540] sm:$0xf]
    %v464 = vld [vmem:[#allocation5 + $0x544] sm:$0xf]
    %v465 = vld [vmem:[#allocation5 + $0x548] sm:$0xf]
    %v466 = vld [vmem:[#allocation5 + $0x54c] sm:$0xf]
    %v467 = vld [vmem:[#allocation5 + $0x550] sm:$0xf]
    %v468 = vld [vmem:[#allocation5 + $0x554] sm:$0xf]
    %v469 = vld [vmem:[#allocation5 + $0x558] sm:$0xf]
    %v470 = vld [vmem:[#allocation5 + $0x55c] sm:$0xf]
    %v471 = vld [vmem:[#allocation5 + $0x560] sm:$0xf]
    %v472 = vld [vmem:[#allocation5 + $0x564] sm:$0xf]
    %v473 = vld [vmem:[#allocation5 + $0x568] sm:$0xf]
    %v474 = vld [vmem:[#allocation5 + $0x56c] sm:$0xf]
    %v475 = vld [vmem:[#allocation5 + $0x570] sm:$0xf]
    %v476 = vld [vmem:[#allocation5 + $0x574] sm:$0xf]
    %v477 = vld [vmem:[#allocation5 + $0x578] sm:$0xf]
    %v478 = vld [vmem:[#allocation5 + $0x57c] sm:$0xf]
    %v479 = vld [vmem:[#allocation5 + $0x580] sm:$0xf]
    %v480 = vld [vmem:[#allocation5 + $0x584] sm:$0xf]
    %v481 = vld [vmem:[#allocation5 + $0x588] sm:$0xf]
    %v482 = vld [vmem:[#allocation5 + $0x58c] sm:$0xf]
    %v483 = vld [vmem:[#allocation5 + $0x590] sm:$0xf]
    %v484 = vld [vmem:[#allocation5 + $0x594] sm:$0xf]
    %v485 = vld [vmem:[#allocation5 + $0x598] sm:$0xf]
    %v486 = vld [vmem:[#allocation5 + $0x59c] sm:$0xf]
    %v487 = vld [vmem:[#allocation5 + $0x5a0] sm:$0xf]
    %v488 = vld [vmem:[#allocation5 + $0x5a4] sm:$0xf]
    %v489 = vld [vmem:[#allocation5 + $0x5a8] sm:$0xf]
    %v490 = vld [vmem:[#allocation5 + $0x5ac] sm:$0xf]
    %v491 = vld [vmem:[#allocation5 + $0x5b0] sm:$0xf]
    %v492 = vld [vmem:[#allocation5 + $0x5b4] sm:$0xf]
    %v493 = vld [vmem:[#allocation5 + $0x5b8] sm:$0xf]
    %v494 = vld [vmem:[#allocation5 + $0x5bc] sm:$0xf]
    %v495 = vld [vmem:[#allocation5 + $0x5c0] sm:$0xf]
    %v496 = vld [vmem:[#allocation5 + $0x5c4] sm:$0xf]
    %v497 = vld [vmem:[#allocation5 + $0x5c8] sm:$0xf]
    %v498 = vld [vmem:[#allocation5 + $0x5cc] sm:$0xf]
    %v499 = vld [vmem:[#allocation5 + $0x5d0] sm:$0xf]
    %v500 = vld [vmem:[#allocation5 + $0x5d4] sm:$0xf]
    %v501 = vld [vmem:[#allocation5 + $0x5d8] sm:$0xf]
    %v502 = vld [vmem:[#allocation5 + $0x5dc] sm:$0xf]
    %v503 = vld [vmem:[#allocation5 + $0x5e0] sm:$0xf]
    %v504 = vld [vmem:[#allocation5 + $0x5e4] sm:$0xf]
    %v505 = vld [vmem:[#allocation5 + $0x5e8] sm:$0xf]
    %v506 = vld [vmem:[#allocation5 + $0x5ec] sm:$0xf]
    %v507 = vld [vmem:[#allocation5 + $0x5f0] sm:$0xf]
    %v508 = vld [vmem:[#allocation5 + $0x5f4] sm:$0xf]
    %v509 = vld [vmem:[#allocation5 + $0x5f8] sm:$0xf]
    %v510 = vld [vmem:[#allocation5 + $0x5fc] sm:$0xf]
    %v511 = vld [vmem:[#allocation5 + $0x600] sm:$0xf]
    %v512 = vld [vmem:[#allocation5 + $0x604] sm:$0xf]
    %v513 = vld [vmem:[#allocation5 + $0x608] sm:$0xf]
    %v514 = vld [vmem:[#allocation5 + $0x60c] sm:$0xf]
    %v515 = vld [vmem:[#allocation5 + $0x610] sm:$0xf]
    %v516 = vld [vmem:[#allocation5 + $0x614] sm:$0xf]
    %v517 = vld [vmem:[#allocation5 + $0x618] sm:$0xf]
    %v518 = vld [vmem:[#allocation5 + $0x61c] sm:$0xf]
    %v519 = vld [vmem:[#allocation5 + $0x620] sm:$0xf]
    %v520 = vld [vmem:[#allocation5 + $0x624] sm:$0xf]
    %v521 = vld [vmem:[#allocation5 + $0x628] sm:$0xf]
    %v522 = vld [vmem:[#allocation5 + $0x62c] sm:$0xf]
    %v523 = vld [vmem:[#allocation5 + $0x630] sm:$0xf]
    %v524 = vld [vmem:[#allocation5 + $0x634] sm:$0xf]
    %v525 = vld [vmem:[#allocation5 + $0x638] sm:$0xf]
    %v526 = vld [vmem:[#allocation5 + $0x63c] sm:$0xf]
    %v527 = vld [vmem:[#allocation5 + $0x640] sm:$0xf]
    %v528 = vld [vmem:[#allocation5 + $0x644] sm:$0xf]
    %v529 = vld [vmem:[#allocation5 + $0x648] sm:$0xf]
    %v530 = vld [vmem:[#allocation5 + $0x64c] sm:$0xf]
    %v531 = vld [vmem:[#allocation5 + $0x650] sm:$0xf]
    %v532 = vld [vmem:[#allocation5 + $0x654] sm:$0xf]
    %v533 = vld [vmem:[#allocation5 + $0x658] sm:$0xf]
    %v534 = vld [vmem:[#allocation5 + $0x65c] sm:$0xf]
    %v535 = vld [vmem:[#allocation5 + $0x660] sm:$0xf]
    %v536 = vld [vmem:[#allocation5 + $0x664] sm:$0xf]
    %v537 = vld [vmem:[#allocation5 + $0x668] sm:$0xf]
    %v538 = vld [vmem:[#allocation5 + $0x66c] sm:$0xf]
    %v539 = vld [vmem:[#allocation5 + $0x670] sm:$0xf]
    %v540 = vld [vmem:[#allocation5 + $0x674] sm:$0xf]
    %v541 = vld [vmem:[#allocation5 + $0x678] sm:$0xf]
    %v542 = vld [vmem:[#allocation5 + $0x67c] sm:$0xf]
    %v543 = vld [vmem:[#allocation5 + $0x680] sm:$0xf]
    %v544 = vld [vmem:[#allocation5 + $0x684] sm:$0xf]
    %v545 = vld [vmem:[#allocation5 + $0x688] sm:$0xf]
    %v546 = vld [vmem:[#allocation5 + $0x68c] sm:$0xf]
    %v547 = vld [vmem:[#allocation5 + $0x690] sm:$0xf]
    %v548 = vld [vmem:[#allocation5 + $0x694] sm:$0xf]
    %v549 = vld [vmem:[#allocation5 + $0x698] sm:$0xf]
    %v550 = vld [vmem:[#allocation5 + $0x69c] sm:$0xf]
    %v551 = vld [vmem:[#allocation5 + $0x6a0] sm:$0xf]
    %v552 = vld [vmem:[#allocation5 + $0x6a4] sm:$0xf]
    %v553 = vld [vmem:[#allocation5 + $0x6a8] sm:$0xf]
    %v554 = vld [vmem:[#allocation5 + $0x6ac] sm:$0xf]
    %v555 = vld [vmem:[#allocation5 + $0x6b0] sm:$0xf]
    %v556 = vld [vmem:[#allocation5 + $0x6b4] sm:$0xf]
    %v557 = vld [vmem:[#allocation5 + $0x6b8] sm:$0xf]
    %v558 = vld [vmem:[#allocation5 + $0x6bc] sm:$0xf]
    %v559 = vld [vmem:[#allocation5 + $0x6c0] sm:$0xf]
    %v560 = vld [vmem:[#allocation5 + $0x6c4] sm:$0xf]
    %v561 = vld [vmem:[#allocation5 + $0x6c8] sm:$0xf]
    %v562 = vld [vmem:[#allocation5 + $0x6cc] sm:$0xf]
    %v563 = vld [vmem:[#allocation5 + $0x6d0] sm:$0xf]
    %v564 = vld [vmem:[#allocation5 + $0x6d4] sm:$0xf]
    %v565 = vld [vmem:[#allocation5 + $0x6d8] sm:$0xf]
    %v566 = vld [vmem:[#allocation5 + $0x6dc] sm:$0xf]
    %v567 = vld [vmem:[#allocation5 + $0x6e0] sm:$0xf]
    %v568 = vld [vmem:[#allocation5 + $0x6e4] sm:$0xf]
    %v569 = vld [vmem:[#allocation5 + $0x6e8] sm:$0xf]
    %v570 = vld [vmem:[#allocation5 + $0x6ec] sm:$0xf]
    %v571 = vld [vmem:[#allocation5 + $0x6f0] sm:$0xf]
    %v572 = vld [vmem:[#allocation5 + $0x6f4] sm:$0xf]
    %v573 = vld [vmem:[#allocation5 + $0x6f8] sm:$0xf]
    %v574 = vld [vmem:[#allocation5 + $0x6fc] sm:$0xf]
    %v575 = vld [vmem:[#allocation5 + $0x700] sm:$0xf]
    %v576 = vld [vmem:[#allocation5 + $0x704] sm:$0xf]
    %v577 = vld [vmem:[#allocation5 + $0x708] sm:$0xf]
    %v578 = vld [vmem:[#allocation5 + $0x70c] sm:$0xf]
    %v579 = vld [vmem:[#allocation5 + $0x710] sm:$0xf]
    %v580 = vld [vmem:[#allocation5 + $0x714] sm:$0xf]
    %v581 = vld [vmem:[#allocation5 + $0x718] sm:$0xf]
    %v582 = vld [vmem:[#allocation5 + $0x71c] sm:$0xf]
    %v583 = vld [vmem:[#allocation5 + $0x720] sm:$0xf]
    %v584 = vld [vmem:[#allocation5 + $0x724] sm:$0xf]
    %v585 = vld [vmem:[#allocation5 + $0x728] sm:$0xf]
    %v586 = vld [vmem:[#allocation5 + $0x72c] sm:$0xf]
    %v587 = vld [vmem:[#allocation5 + $0x730] sm:$0xf]
    %v588 = vld [vmem:[#allocation5 + $0x734] sm:$0xf]
    %v589 = vld [vmem:[#allocation5 + $0x738] sm:$0xf]
    %v590 = vld [vmem:[#allocation5 + $0x73c] sm:$0xf]
    %v591 = vld [vmem:[#allocation5 + $0x740] sm:$0xf]
    %v592 = vld [vmem:[#allocation5 + $0x744] sm:$0xf]
    %v593 = vld [vmem:[#allocation5 + $0x748] sm:$0xf]
    %v594 = vld [vmem:[#allocation5 + $0x74c] sm:$0xf]
    %v595 = vld [vmem:[#allocation5 + $0x750] sm:$0xf]
    %v596 = vld [vmem:[#allocation5 + $0x754] sm:$0xf]
    %v597 = vld [vmem:[#allocation5 + $0x758] sm:$0xf]
    %v598 = vld [vmem:[#allocation5 + $0x75c] sm:$0xf]
    %v599 = vld [vmem:[#allocation5 + $0x760] sm:$0xf]
    %v600 = vld [vmem:[#allocation5 + $0x764] sm:$0xf]
    %v601 = vld [vmem:[#allocation5 + $0x768] sm:$0xf]
    %v602 = vld [vmem:[#allocation5 + $0x76c] sm:$0xf]
    %v603 = vld [vmem:[#allocation5 + $0x770] sm:$0xf]
    %v604 = vld [vmem:[#allocation5 + $0x774] sm:$0xf]
    %v605 = vld [vmem:[#allocation5 + $0x778] sm:$0xf]
    %v606 = vld [vmem:[#allocation5 + $0x77c] sm:$0xf]
    %v607 = vld [vmem:[#allocation5 + $0x780] sm:$0xf]
    %v608 = vld [vmem:[#allocation5 + $0x784] sm:$0xf]
    %v609 = vld [vmem:[#allocation5 + $0x788] sm:$0xf]
    %v610 = vld [vmem:[#allocation5 + $0x78c] sm:$0xf]
    %v611 = vld [vmem:[#allocation5 + $0x790] sm:$0xf]
    %v612 = vld [vmem:[#allocation5 + $0x794] sm:$0xf]
    %v613 = vld [vmem:[#allocation5 + $0x798] sm:$0xf]
    %v614 = vld [vmem:[#allocation5 + $0x79c] sm:$0xf]
    %v615 = vld [vmem:[#allocation5 + $0x7a0] sm:$0xf]
    %v616 = vld [vmem:[#allocation5 + $0x7a4] sm:$0xf]
    %v617 = vld [vmem:[#allocation5 + $0x7a8] sm:$0xf]
    %v618 = vld [vmem:[#allocation5 + $0x7ac] sm:$0xf]
    %v619 = vld [vmem:[#allocation5 + $0x7b0] sm:$0xf]
    %v620 = vld [vmem:[#allocation5 + $0x7b4] sm:$0xf]
    %v621 = vld [vmem:[#allocation5 + $0x7b8] sm:$0xf]
    %v622 = vld [vmem:[#allocation5 + $0x7bc] sm:$0xf]
    %v623 = vld [vmem:[#allocation5 + $0x7c0] sm:$0xf]
    %v624 = vld [vmem:[#allocation5 + $0x7c4] sm:$0xf]
    %v625 = vld [vmem:[#allocation5 + $0x7c8] sm:$0xf]
    %v626 = vld [vmem:[#allocation5 + $0x7cc] sm:$0xf]
    %v627 = vld [vmem:[#allocation5 + $0x7d0] sm:$0xf]
    %v628 = vld [vmem:[#allocation5 + $0x7d4] sm:$0xf]
    %v629 = vld [vmem:[#allocation5 + $0x7d8] sm:$0xf]
    %v630 = vld [vmem:[#allocation5 + $0x7dc] sm:$0xf]
    %v631 = vld [vmem:[#allocation5 + $0x7e0] sm:$0xf]
    %v632 = vld [vmem:[#allocation5 + $0x7e4] sm:$0xf]
    %v633 = vld [vmem:[#allocation5 + $0x7e8] sm:$0xf]
    %v634 = vld [vmem:[#allocation5 + $0x7ec] sm:$0xf]
    %v635 = vld [vmem:[#allocation5 + $0x7f0] sm:$0xf]
    %v636 = vld [vmem:[#allocation5 + $0x7f4] sm:$0xf]
    %v637 = vld [vmem:[#allocation5 + $0x7f8] sm:$0xf]
    %v638 = vld [vmem:[#allocation5 + $0x7fc] sm:$0xf]
    %v1151 = vunpack.c.l.b16 %v127
    %v1152 = vunpack.c.l.b16 %v128
    %v1153 = vunpack.c.l.b16 %v129
    %v1154 = vunpack.c.l.b16 %v130
    %v1155 = vunpack.c.l.b16 %v131
    %v1156 = vunpack.c.l.b16 %v132
    %v1157 = vunpack.c.l.b16 %v133
    %v1158 = vunpack.c.l.b16 %v134
    %v1159 = vunpack.c.l.b16 %v135
    %v1160 = vunpack.c.l.b16 %v136
    %v1161 = vunpack.c.l.b16 %v137
    %v1162 = vunpack.c.l.b16 %v138
    %v1163 = vunpack.c.l.b16 %v139
    %v1164 = vunpack.c.l.b16 %v140
    %v1165 = vunpack.c.l.b16 %v141
    %v1166 = vunpack.c.l.b16 %v142
    %v1167 = vunpack.c.l.b16 %v143
    %v1168 = vunpack.c.l.b16 %v144
    %v1169 = vunpack.c.l.b16 %v145
    %v1170 = vunpack.c.l.b16 %v146
    %v1171 = vunpack.c.l.b16 %v147
    %v1172 = vunpack.c.l.b16 %v148
    %v1173 = vunpack.c.l.b16 %v149
    %v1174 = vunpack.c.l.b16 %v150
    %v1175 = vunpack.c.l.b16 %v151
    %v1176 = vunpack.c.l.b16 %v152
    %v1177 = vunpack.c.l.b16 %v153
    %v1178 = vunpack.c.l.b16 %v154
    %v1179 = vunpack.c.l.b16 %v155
    %v1180 = vunpack.c.l.b16 %v156
    %v1181 = vunpack.c.l.b16 %v157
    %v1182 = vunpack.c.l.b16 %v158
    %v1183 = vunpack.c.l.b16 %v159
    %v1184 = vunpack.c.l.b16 %v160
    %v1185 = vunpack.c.l.b16 %v161
    %v1186 = vunpack.c.l.b16 %v162
    %v1187 = vunpack.c.l.b16 %v163
    %v1188 = vunpack.c.l.b16 %v164
    %v1189 = vunpack.c.l.b16 %v165
    %v1190 = vunpack.c.l.b16 %v166
    %v1191 = vunpack.c.l.b16 %v167
    %v1192 = vunpack.c.l.b16 %v168
    %v1193 = vunpack.c.l.b16 %v169
    %v1194 = vunpack.c.l.b16 %v170
    %v1195 = vunpack.c.l.b16 %v171
    %v1196 = vunpack.c.l.b16 %v172
    %v1197 = vunpack.c.l.b16 %v173
    %v1198 = vunpack.c.l.b16 %v174
    %v1199 = vunpack.c.l.b16 %v175
    %v1200 = vunpack.c.l.b16 %v176
    %v1201 = vunpack.c.l.b16 %v177
    %v1202 = vunpack.c.l.b16 %v178
    %v1203 = vunpack.c.l.b16 %v179
    %v1204 = vunpack.c.l.b16 %v180
    %v1205 = vunpack.c.l.b16 %v181
    %v1206 = vunpack.c.l.b16 %v182
    %v1207 = vunpack.c.l.b16 %v183
    %v1208 = vunpack.c.l.b16 %v184
    %v1209 = vunpack.c.l.b16 %v185
    %v1210 = vunpack.c.l.b16 %v186
    %v1211 = vunpack.c.l.b16 %v187
    %v1212 = vunpack.c.l.b16 %v188
    %v1213 = vunpack.c.l.b16 %v189
    %v1214 = vunpack.c.l.b16 %v190
    %v1215 = vunpack.c.l.b16 %v191
    %v1216 = vunpack.c.l.b16 %v192
    %v1217 = vunpack.c.l.b16 %v193
    %v1218 = vunpack.c.l.b16 %v194
    %v1219 = vunpack.c.l.b16 %v195
    %v1220 = vunpack.c.l.b16 %v196
    %v1221 = vunpack.c.l.b16 %v197
    %v1222 = vunpack.c.l.b16 %v198
    %v1223 = vunpack.c.l.b16 %v199
    %v1224 = vunpack.c.l.b16 %v200
    %v1225 = vunpack.c.l.b16 %v201
    %v1226 = vunpack.c.l.b16 %v202
    %v1227 = vunpack.c.l.b16 %v203
    %v1228 = vunpack.c.l.b16 %v204
    %v1229 = vunpack.c.l.b16 %v205
    %v1230 = vunpack.c.l.b16 %v206
    %v1231 = vunpack.c.l.b16 %v207
    %v1232 = vunpack.c.l.b16 %v208
    %v1233 = vunpack.c.l.b16 %v209
    %v1234 = vunpack.c.l.b16 %v210
    %v1235 = vunpack.c.l.b16 %v211
    %v1236 = vunpack.c.l.b16 %v212
    %v1237 = vunpack.c.l.b16 %v213
    %v1238 = vunpack.c.l.b16 %v214
    %v1239 = vunpack.c.l.b16 %v215
    %v1240 = vunpack.c.l.b16 %v216
    %v1241 = vunpack.c.l.b16 %v217
    %v1242 = vunpack.c.l.b16 %v218
    %v1243 = vunpack.c.l.b16 %v219
    %v1244 = vunpack.c.l.b16 %v220
    %v1245 = vunpack.c.l.b16 %v221
    %v1246 = vunpack.c.l.b16 %v222
    %v1247 = vunpack.c.l.b16 %v223
    %v1248 = vunpack.c.l.b16 %v224
    %v1249 = vunpack.c.l.b16 %v225
    %v1250 = vunpack.c.l.b16 %v226
    %v1251 = vunpack.c.l.b16 %v227
    %v1252 = vunpack.c.l.b16 %v228
    %v1253 = vunpack.c.l.b16 %v229
    %v1254 = vunpack.c.l.b16 %v230
    %v1255 = vunpack.c.l.b16 %v231
    %v1256 = vunpack.c.l.b16 %v232
    %v1257 = vunpack.c.l.b16 %v233
    %v1258 = vunpack.c.l.b16 %v234
    %v1259 = vunpack.c.l.b16 %v235
    %v1260 = vunpack.c.l.b16 %v236
    %v1261 = vunpack.c.l.b16 %v237
    %v1262 = vunpack.c.l.b16 %v238
    %v1263 = vunpack.c.l.b16 %v239
    %v1264 = vunpack.c.l.b16 %v240
    %v1265 = vunpack.c.l.b16 %v241
    %v1266 = vunpack.c.l.b16 %v242
    %v1267 = vunpack.c.l.b16 %v243
    %v1268 = vunpack.c.l.b16 %v244
    %v1269 = vunpack.c.l.b16 %v245
    %v1270 = vunpack.c.l.b16 %v246
    %v1271 = vunpack.c.l.b16 %v247
    %v1272 = vunpack.c.l.b16 %v248
    %v1273 = vunpack.c.l.b16 %v249
    %v1274 = vunpack.c.l.b16 %v250
    %v1275 = vunpack.c.l.b16 %v251
    %v1276 = vunpack.c.l.b16 %v252
    %v1277 = vunpack.c.l.b16 %v253
    %v1278 = vunpack.c.l.b16 %v254
    %v1279 = vunpack.c.l.b16 %v255
    %v1280 = vunpack.c.l.b16 %v256
    %v1281 = vunpack.c.l.b16 %v257
    %v1282 = vunpack.c.l.b16 %v258
    %v1283 = vunpack.c.l.b16 %v259
    %v1284 = vunpack.c.l.b16 %v260
    %v1285 = vunpack.c.l.b16 %v261
    %v1286 = vunpack.c.l.b16 %v262
    %v1287 = vunpack.c.l.b16 %v263
    %v1288 = vunpack.c.l.b16 %v264
    %v1289 = vunpack.c.l.b16 %v265
    %v1290 = vunpack.c.l.b16 %v266
    %v1291 = vunpack.c.l.b16 %v267
    %v1292 = vunpack.c.l.b16 %v268
    %v1293 = vunpack.c.l.b16 %v269
    %v1294 = vunpack.c.l.b16 %v270
    %v1295 = vunpack.c.l.b16 %v271
    %v1296 = vunpack.c.l.b16 %v272
    %v1297 = vunpack.c.l.b16 %v273
    %v1298 = vunpack.c.l.b16 %v274
    %v1299 = vunpack.c.l.b16 %v275
    %v1300 = vunpack.c.l.b16 %v276
    %v1301 = vunpack.c.l.b16 %v277
    %v1302 = vunpack.c.l.b16 %v278
    %v1303 = vunpack.c.l.b16 %v279
    %v1304 = vunpack.c.l.b16 %v280
    %v1305 = vunpack.c.l.b16 %v281
    %v1306 = vunpack.c.l.b16 %v282
    %v1307 = vunpack.c.l.b16 %v283
    %v1308 = vunpack.c.l.b16 %v284
    %v1309 = vunpack.c.l.b16 %v285
    %v1310 = vunpack.c.l.b16 %v286
    %v1311 = vunpack.c.l.b16 %v287
    %v1312 = vunpack.c.l.b16 %v288
    %v1313 = vunpack.c.l.b16 %v289
    %v1314 = vunpack.c.l.b16 %v290
    %v1315 = vunpack.c.l.b16 %v291
    %v1316 = vunpack.c.l.b16 %v292
    %v1317 = vunpack.c.l.b16 %v293
    %v1318 = vunpack.c.l.b16 %v294
    %v1319 = vunpack.c.l.b16 %v295
    %v1320 = vunpack.c.l.b16 %v296
    %v1321 = vunpack.c.l.b16 %v297
    %v1322 = vunpack.c.l.b16 %v298
    %v1323 = vunpack.c.l.b16 %v299
    %v1324 = vunpack.c.l.b16 %v300
    %v1325 = vunpack.c.l.b16 %v301
    %v1326 = vunpack.c.l.b16 %v302
    %v1327 = vunpack.c.l.b16 %v303
    %v1328 = vunpack.c.l.b16 %v304
    %v1329 = vunpack.c.l.b16 %v305
    %v1330 = vunpack.c.l.b16 %v306
    %v1331 = vunpack.c.l.b16 %v307
    %v1332 = vunpack.c.l.b16 %v308
    %v1333 = vunpack.c.l.b16 %v309
    %v1334 = vunpack.c.l.b16 %v310
    %v1335 = vunpack.c.l.b16 %v311
    %v1336 = vunpack.c.l.b16 %v312
    %v1337 = vunpack.c.l.b16 %v313
    %v1338 = vunpack.c.l.b16 %v314
    %v1339 = vunpack.c.l.b16 %v315
    %v1340 = vunpack.c.l.b16 %v316
    %v1341 = vunpack.c.l.b16 %v317
    %v1342 = vunpack.c.l.b16 %v318
    %v1343 = vunpack.c.l.b16 %v319
    %v1344 = vunpack.c.l.b16 %v320
    %v1345 = vunpack.c.l.b16 %v321
    %v1346 = vunpack.c.l.b16 %v322
    %v1347 = vunpack.c.l.b16 %v323
    %v1348 = vunpack.c.l.b16 %v324
    %v1349 = vunpack.c.l.b16 %v325
    %v1350 = vunpack.c.l.b16 %v326
    %v1351 = vunpack.c.l.b16 %v327
    %v1352 = vunpack.c.l.b16 %v328
    %v1353 = vunpack.c.l.b16 %v329
    %v1354 = vunpack.c.l.b16 %v330
    %v1355 = vunpack.c.l.b16 %v331
    %v1356 = vunpack.c.l.b16 %v332
    %v1357 = vunpack.c.l.b16 %v333
    %v1358 = vunpack.c.l.b16 %v334
    %v1359 = vunpack.c.l.b16 %v335
    %v1360 = vunpack.c.l.b16 %v336
    %v1361 = vunpack.c.l.b16 %v337
    %v1362 = vunpack.c.l.b16 %v338
    %v1363 = vunpack.c.l.b16 %v339
    %v1364 = vunpack.c.l.b16 %v340
    %v1365 = vunpack.c.l.b16 %v341
    %v1366 = vunpack.c.l.b16 %v342
    %v1367 = vunpack.c.l.b16 %v343
    %v1368 = vunpack.c.l.b16 %v344
    %v1369 = vunpack.c.l.b16 %v345
    %v1370 = vunpack.c.l.b16 %v346
    %v1371 = vunpack.c.l.b16 %v347
    %v1372 = vunpack.c.l.b16 %v348
    %v1373 = vunpack.c.l.b16 %v349
    %v1374 = vunpack.c.l.b16 %v350
    %v1375 = vunpack.c.l.b16 %v351
    %v1376 = vunpack.c.l.b16 %v352
    %v1377 = vunpack.c.l.b16 %v353
    %v1378 = vunpack.c.l.b16 %v354
    %v1379 = vunpack.c.l.b16 %v355
    %v1380 = vunpack.c.l.b16 %v356
    %v1381 = vunpack.c.l.b16 %v357
    %v1382 = vunpack.c.l.b16 %v358
    %v1383 = vunpack.c.l.b16 %v359
    %v1384 = vunpack.c.l.b16 %v360
    %v1385 = vunpack.c.l.b16 %v361
    %v1386 = vunpack.c.l.b16 %v362
    %v1387 = vunpack.c.l.b16 %v363
    %v1388 = vunpack.c.l.b16 %v364
    %v1389 = vunpack.c.l.b16 %v365
    %v1390 = vunpack.c.l.b16 %v366
    %v1391 = vunpack.c.l.b16 %v367
    %v1392 = vunpack.c.l.b16 %v368
    %v1393 = vunpack.c.l.b16 %v369
    %v1394 = vunpack.c.l.b16 %v370
    %v1395 = vunpack.c.l.b16 %v371
    %v1396 = vunpack.c.l.b16 %v372
    %v1397 = vunpack.c.l.b16 %v373
    %v1398 = vunpack.c.l.b16 %v374
    %v1399 = vunpack.c.l.b16 %v375
    %v1400 = vunpack.c.l.b16 %v376
    %v1401 = vunpack.c.l.b16 %v377
    %v1402 = vunpack.c.l.b16 %v378
    %v1403 = vunpack.c.l.b16 %v379
    %v1404 = vunpack.c.l.b16 %v380
    %v1405 = vunpack.c.l.b16 %v381
    %v1406 = vunpack.c.l.b16 %v382
    %v1407 = vunpack.c.l.b16 %v383
    %v1408 = vunpack.c.l.b16 %v384
    %v1409 = vunpack.c.l.b16 %v385
    %v1410 = vunpack.c.l.b16 %v386
    %v1411 = vunpack.c.l.b16 %v387
    %v1412 = vunpack.c.l.b16 %v388
    %v1413 = vunpack.c.l.b16 %v389
    %v1414 = vunpack.c.l.b16 %v390
    %v1415 = vunpack.c.l.b16 %v391
    %v1416 = vunpack.c.l.b16 %v392
    %v1417 = vunpack.c.l.b16 %v393
    %v1418 = vunpack.c.l.b16 %v394
    %v1419 = vunpack.c.l.b16 %v395
    %v1420 = vunpack.c.l.b16 %v396
    %v1421 = vunpack.c.l.b16 %v397
    %v1422 = vunpack.c.l.b16 %v398
    %v1423 = vunpack.c.l.b16 %v399
    %v1424 = vunpack.c.l.b16 %v400
    %v1425 = vunpack.c.l.b16 %v401
    %v1426 = vunpack.c.l.b16 %v402
    %v1427 = vunpack.c.l.b16 %v403
    %v1428 = vunpack.c.l.b16 %v404
    %v1429 = vunpack.c.l.b16 %v405
    %v1430 = vunpack.c.l.b16 %v406
    %v1431 = vunpack.c.l.b16 %v407
    %v1432 = vunpack.c.l.b16 %v408
    %v1433 = vunpack.c.l.b16 %v409
    %v1434 = vunpack.c.l.b16 %v410
    %v1435 = vunpack.c.l.b16 %v411
    %v1436 = vunpack.c.l.b16 %v412
    %v1437 = vunpack.c.l.b16 %v413
    %v1438 = vunpack.c.l.b16 %v414
    %v1439 = vunpack.c.l.b16 %v415
    %v1440 = vunpack.c.l.b16 %v416
    %v1441 = vunpack.c.l.b16 %v417
    %v1442 = vunpack.c.l.b16 %v418
    %v1443 = vunpack.c.l.b16 %v419
    %v1444 = vunpack.c.l.b16 %v420
    %v1445 = vunpack.c.l.b16 %v421
    %v1446 = vunpack.c.l.b16 %v422
    %v1447 = vunpack.c.l.b16 %v423
    %v1448 = vunpack.c.l.b16 %v424
    %v1449 = vunpack.c.l.b16 %v425
    %v1450 = vunpack.c.l.b16 %v426
    %v1451 = vunpack.c.l.b16 %v427
    %v1452 = vunpack.c.l.b16 %v428
    %v1453 = vunpack.c.l.b16 %v429
    %v1454 = vunpack.c.l.b16 %v430
    %v1455 = vunpack.c.l.b16 %v431
    %v1456 = vunpack.c.l.b16 %v432
    %v1457 = vunpack.c.l.b16 %v433
    %v1458 = vunpack.c.l.b16 %v434
    %v1459 = vunpack.c.l.b16 %v435
    %v1460 = vunpack.c.l.b16 %v436
    %v1461 = vunpack.c.l.b16 %v437
    %v1462 = vunpack.c.l.b16 %v438
    %v1463 = vunpack.c.l.b16 %v439
    %v1464 = vunpack.c.l.b16 %v440
    %v1465 = vunpack.c.l.b16 %v441
    %v1466 = vunpack.c.l.b16 %v442
    %v1467 = vunpack.c.l.b16 %v443
    %v1468 = vunpack.c.l.b16 %v444
    %v1469 = vunpack.c.l.b16 %v445
    %v1470 = vunpack.c.l.b16 %v446
    %v1471 = vunpack.c.l.b16 %v447
    %v1472 = vunpack.c.l.b16 %v448
    %v1473 = vunpack.c.l.b16 %v449
    %v1474 = vunpack.c.l.b16 %v450
    %v1475 = vunpack.c.l.b16 %v451
    %v1476 = vunpack.c.l.b16 %v452
    %v1477 = vunpack.c.l.b16 %v453
    %v1478 = vunpack.c.l.b16 %v454
    %v1479 = vunpack.c.l.b16 %v455
    %v1480 = vunpack.c.l.b16 %v456
    %v1481 = vunpack.c.l.b16 %v457
    %v1482 = vunpack.c.l.b16 %v458
    %v1483 = vunpack.c.l.b16 %v459
    %v1484 = vunpack.c.l.b16 %v460
    %v1485 = vunpack.c.l.b16 %v461
    %v1486 = vunpack.c.l.b16 %v462
    %v1487 = vunpack.c.l.b16 %v463
    %v1488 = vunpack.c.l.b16 %v464
    %v1489 = vunpack.c.l.b16 %v465
    %v1490 = vunpack.c.l.b16 %v466
    %v1491 = vunpack.c.l.b16 %v467
    %v1492 = vunpack.c.l.b16 %v468
    %v1493 = vunpack.c.l.b16 %v469
    %v1494 = vunpack.c.l.b16 %v470
    %v1495 = vunpack.c.l.b16 %v471
    %v1496 = vunpack.c.l.b16 %v472
    %v1497 = vunpack.c.l.b16 %v473
    %v1498 = vunpack.c.l.b16 %v474
    %v1499 = vunpack.c.l.b16 %v475
    %v1500 = vunpack.c.l.b16 %v476
    %v1501 = vunpack.c.l.b16 %v477
    %v1502 = vunpack.c.l.b16 %v478
    %v1503 = vunpack.c.l.b16 %v479
    %v1504 = vunpack.c.l.b16 %v480
    %v1505 = vunpack.c.l.b16 %v481
    %v1506 = vunpack.c.l.b16 %v482
    %v1507 = vunpack.c.l.b16 %v483
    %v1508 = vunpack.c.l.b16 %v484
    %v1509 = vunpack.c.l.b16 %v485
    %v1510 = vunpack.c.l.b16 %v486
    %v1511 = vunpack.c.l.b16 %v487
    %v1512 = vunpack.c.l.b16 %v488
    %v1513 = vunpack.c.l.b16 %v489
    %v1514 = vunpack.c.l.b16 %v490
    %v1515 = vunpack.c.l.b16 %v491
    %v1516 = vunpack.c.l.b16 %v492
    %v1517 = vunpack.c.l.b16 %v493
    %v1518 = vunpack.c.l.b16 %v494
    %v1519 = vunpack.c.l.b16 %v495
    %v1520 = vunpack.c.l.b16 %v496
    %v1521 = vunpack.c.l.b16 %v497
    %v1522 = vunpack.c.l.b16 %v498
    %v1523 = vunpack.c.l.b16 %v499
    %v1524 = vunpack.c.l.b16 %v500
    %v1525 = vunpack.c.l.b16 %v501
    %v1526 = vunpack.c.l.b16 %v502
    %v1527 = vunpack.c.l.b16 %v503
    %v1528 = vunpack.c.l.b16 %v504
    %v1529 = vunpack.c.l.b16 %v505
    %v1530 = vunpack.c.l.b16 %v506
    %v1531 = vunpack.c.l.b16 %v507
    %v1532 = vunpack.c.l.b16 %v508
    %v1533 = vunpack.c.l.b16 %v509
    %v1534 = vunpack.c.l.b16 %v510
    %v1535 = vunpack.c.l.b16 %v511
    %v1536 = vunpack.c.l.b16 %v512
    %v1537 = vunpack.c.l.b16 %v513
    %v1538 = vunpack.c.l.b16 %v514
    %v1539 = vunpack.c.l.b16 %v515
    %v1540 = vunpack.c.l.b16 %v516
    %v1541 = vunpack.c.l.b16 %v517
    %v1542 = vunpack.c.l.b16 %v518
    %v1543 = vunpack.c.l.b16 %v519
    %v1544 = vunpack.c.l.b16 %v520
    %v1545 = vunpack.c.l.b16 %v521
    %v1546 = vunpack.c.l.b16 %v522
    %v1547 = vunpack.c.l.b16 %v523
    %v1548 = vunpack.c.l.b16 %v524
    %v1549 = vunpack.c.l.b16 %v525
    %v1550 = vunpack.c.l.b16 %v526
    %v1551 = vunpack.c.l.b16 %v527
    %v1552 = vunpack.c.l.b16 %v528
    %v1553 = vunpack.c.l.b16 %v529
    %v1554 = vunpack.c.l.b16 %v530
    %v1555 = vunpack.c.l.b16 %v531
    %v1556 = vunpack.c.l.b16 %v532
    %v1557 = vunpack.c.l.b16 %v533
    %v1558 = vunpack.c.l.b16 %v534
    %v1559 = vunpack.c.l.b16 %v535
    %v1560 = vunpack.c.l.b16 %v536
    %v1561 = vunpack.c.l.b16 %v537
    %v1562 = vunpack.c.l.b16 %v538
    %v1563 = vunpack.c.l.b16 %v539
    %v1564 = vunpack.c.l.b16 %v540
    %v1565 = vunpack.c.l.b16 %v541
    %v1566 = vunpack.c.l.b16 %v542
    %v1567 = vunpack.c.l.b16 %v543
    %v1568 = vunpack.c.l.b16 %v544
    %v1569 = vunpack.c.l.b16 %v545
    %v1570 = vunpack.c.l.b16 %v546
    %v1571 = vunpack.c.l.b16 %v547
    %v1572 = vunpack.c.l.b16 %v548
    %v1573 = vunpack.c.l.b16 %v549
    %v1574 = vunpack.c.l.b16 %v550
    %v1575 = vunpack.c.l.b16 %v551
    %v1576 = vunpack.c.l.b16 %v552
    %v1577 = vunpack.c.l.b16 %v553
    %v1578 = vunpack.c.l.b16 %v554
    %v1579 = vunpack.c.l.b16 %v555
    %v1580 = vunpack.c.l.b16 %v556
    %v1581 = vunpack.c.l.b16 %v557
    %v1582 = vunpack.c.l.b16 %v558
    %v1583 = vunpack.c.l.b16 %v559
    %v1584 = vunpack.c.l.b16 %v560
    %v1585 = vunpack.c.l.b16 %v561
    %v1586 = vunpack.c.l.b16 %v562
    %v1587 = vunpack.c.l.b16 %v563
    %v1588 = vunpack.c.l.b16 %v564
    %v1589 = vunpack.c.l.b16 %v565
    %v1590 = vunpack.c.l.b16 %v566
    %v1591 = vunpack.c.l.b16 %v567
    %v1592 = vunpack.c.l.b16 %v568
    %v1593 = vunpack.c.l.b16 %v569
    %v1594 = vunpack.c.l.b16 %v570
    %v1595 = vunpack.c.l.b16 %v571
    %v1596 = vunpack.c.l.b16 %v572
    %v1597 = vunpack.c.l.b16 %v573
    %v1598 = vunpack.c.l.b16 %v574
    %v1599 = vunpack.c.l.b16 %v575
    %v1600 = vunpack.c.l.b16 %v576
    %v1601 = vunpack.c.l.b16 %v577
    %v1602 = vunpack.c.l.b16 %v578
    %v1603 = vunpack.c.l.b16 %v579
    %v1604 = vunpack.c.l.b16 %v580
    %v1605 = vunpack.c.l.b16 %v581
    %v1606 = vunpack.c.l.b16 %v582
    %v1607 = vunpack.c.l.b16 %v583
    %v1608 = vunpack.c.l.b16 %v584
    %v1609 = vunpack.c.l.b16 %v585
    %v1610 = vunpack.c.l.b16 %v586
    %v1611 = vunpack.c.l.b16 %v587
    %v1612 = vunpack.c.l.b16 %v588
    %v1613 = vunpack.c.l.b16 %v589
    %v1614 = vunpack.c.l.b16 %v590
    %v1615 = vunpack.c.l.b16 %v591
    %v1616 = vunpack.c.l.b16 %v592
    %v1617 = vunpack.c.l.b16 %v593
    %v1618 = vunpack.c.l.b16 %v594
    %v1619 = vunpack.c.l.b16 %v595
    %v1620 = vunpack.c.l.b16 %v596
    %v1621 = vunpack.c.l.b16 %v597
    %v1622 = vunpack.c.l.b16 %v598
    %v1623 = vunpack.c.l.b16 %v599
    %v1624 = vunpack.c.l.b16 %v600
    %v1625 = vunpack.c.l.b16 %v601
    %v1626 = vunpack.c.l.b16 %v602
    %v1627 = vunpack.c.l.b16 %v603
    %v1628 = vunpack.c.l.b16 %v604
    %v1629 = vunpack.c.l.b16 %v605
    %v1630 = vunpack.c.l.b16 %v606
    %v1631 = vunpack.c.l.b16 %v607
    %v1632 = vunpack.c.l.b16 %v608
    %v1633 = vunpack.c.l.b16 %v609
    %v1634 = vunpack.c.l.b16 %v610
    %v1635 = vunpack.c.l.b16 %v611
    %v1636 = vunpack.c.l.b16 %v612
    %v1637 = vunpack.c.l.b16 %v613
    %v1638 = vunpack.c.l.b16 %v614
    %v1639 = vunpack.c.l.b16 %v615
    %v1640 = vunpack.c.l.b16 %v616
    %v1641 = vunpack.c.l.b16 %v617
    %v1642 = vunpack.c.l.b16 %v618
    %v1643 = vunpack.c.l.b16 %v619
    %v1644 = vunpack.c.l.b16 %v620
    %v1645 = vunpack.c.l.b16 %v621
    %v1646 = vunpack.c.l.b16 %v622
    %v1647 = vunpack.c.l.b16 %v623
    %v1648 = vunpack.c.l.b16 %v624
    %v1649 = vunpack.c.l.b16 %v625
    %v1650 = vunpack.c.l.b16 %v626
    %v1651 = vunpack.c.l.b16 %v627
    %v1652 = vunpack.c.l.b16 %v628
    %v1653 = vunpack.c.l.b16 %v629
    %v1654 = vunpack.c.l.b16 %v630
    %v1655 = vunpack.c.l.b16 %v631
    %v1656 = vunpack.c.l.b16 %v632
    %v1657 = vunpack.c.l.b16 %v633
    %v1658 = vunpack.c.l.b16 %v634
    %v1659 = vunpack.c.l.b16 %v635
    %v1660 = vunpack.c.l.b16 %v636
    %v1661 = vunpack.c.l.b16 %v637
    %v1662 = vunpack.c.l.b16 %v638
    %v1663 = vpack.c.b16 %v1152, %v1151
    %v1664 = vpack.c.b16 %v1154, %v1153
    %v1665 = vpack.c.b16 %v1156, %v1155
    %v1666 = vpack.c.b16 %v1158, %v1157
    %v1667 = vpack.c.b16 %v1160, %v1159
    %v1668 = vpack.c.b16 %v1162, %v1161
    %v1669 = vpack.c.b16 %v1164, %v1163
    %v1670 = vpack.c.b16 %v1166, %v1165
    %v1671 = vpack.c.b16 %v1168, %v1167
    %v1672 = vpack.c.b16 %v1170, %v1169
    %v1673 = vpack.c.b16 %v1172, %v1171
    %v1674 = vpack.c.b16 %v1174, %v1173
    %v1675 = vpack.c.b16 %v1176, %v1175
    %v1676 = vpack.c.b16 %v1178, %v1177
    %v1677 = vpack.c.b16 %v1180, %v1179
    %v1678 = vpack.c.b16 %v1182, %v1181
    %v1679 = vpack.c.b16 %v1184, %v1183
    %v1680 = vpack.c.b16 %v1186, %v1185
    %v1681 = vpack.c.b16 %v1188, %v1187
    %v1682 = vpack.c.b16 %v1190, %v1189
    %v1683 = vpack.c.b16 %v1192, %v1191
    %v1684 = vpack.c.b16 %v1194, %v1193
    %v1685 = vpack.c.b16 %v1196, %v1195
    %v1686 = vpack.c.b16 %v1198, %v1197
    %v1687 = vpack.c.b16 %v1200, %v1199
    %v1688 = vpack.c.b16 %v1202, %v1201
    %v1689 = vpack.c.b16 %v1204, %v1203
    %v1690 = vpack.c.b16 %v1206, %v1205
    %v1691 = vpack.c.b16 %v1208, %v1207
    %v1692 = vpack.c.b16 %v1210, %v1209
    %v1693 = vpack.c.b16 %v1212, %v1211
    %v1694 = vpack.c.b16 %v1214, %v1213
    %v1695 = vpack.c.b16 %v1216, %v1215
    %v1696 = vpack.c.b16 %v1218, %v1217
    %v1697 = vpack.c.b16 %v1220, %v1219
    %v1698 = vpack.c.b16 %v1222, %v1221
    %v1699 = vpack.c.b16 %v1224, %v1223
    %v1700 = vpack.c.b16 %v1226, %v1225
    %v1701 = vpack.c.b16 %v1228, %v1227
    %v1702 = vpack.c.b16 %v1230, %v1229
    %v1703 = vpack.c.b16 %v1232, %v1231
    %v1704 = vpack.c.b16 %v1234, %v1233
    %v1705 = vpack.c.b16 %v1236, %v1235
    %v1706 = vpack.c.b16 %v1238, %v1237
    %v1707 = vpack.c.b16 %v1240, %v1239
    %v1708 = vpack.c.b16 %v1242, %v1241
    %v1709 = vpack.c.b16 %v1244, %v1243
    %v1710 = vpack.c.b16 %v1246, %v1245
    %v1711 = vpack.c.b16 %v1248, %v1247
    %v1712 = vpack.c.b16 %v1250, %v1249
    %v1713 = vpack.c.b16 %v1252, %v1251
    %v1714 = vpack.c.b16 %v1254, %v1253
    %v1715 = vpack.c.b16 %v1256, %v1255
    %v1716 = vpack.c.b16 %v1258, %v1257
    %v1717 = vpack.c.b16 %v1260, %v1259
    %v1718 = vpack.c.b16 %v1262, %v1261
    %v1719 = vpack.c.b16 %v1264, %v1263
    %v1720 = vpack.c.b16 %v1266, %v1265
    %v1721 = vpack.c.b16 %v1268, %v1267
    %v1722 = vpack.c.b16 %v1270, %v1269
    %v1723 = vpack.c.b16 %v1272, %v1271
    %v1724 = vpack.c.b16 %v1274, %v1273
    %v1725 = vpack.c.b16 %v1276, %v1275
    %v1726 = vpack.c.b16 %v1278, %v1277
    %v1727 = vpack.c.b16 %v1280, %v1279
    %v1728 = vpack.c.b16 %v1282, %v1281
    %v1729 = vpack.c.b16 %v1284, %v1283
    %v1730 = vpack.c.b16 %v1286, %v1285
    %v1731 = vpack.c.b16 %v1288, %v1287
    %v1732 = vpack.c.b16 %v1290, %v1289
    %v1733 = vpack.c.b16 %v1292, %v1291
    %v1734 = vpack.c.b16 %v1294, %v1293
    %v1735 = vpack.c.b16 %v1296, %v1295
    %v1736 = vpack.c.b16 %v1298, %v1297
    %v1737 = vpack.c.b16 %v1300, %v1299
    %v1738 = vpack.c.b16 %v1302, %v1301
    %v1739 = vpack.c.b16 %v1304, %v1303
    %v1740 = vpack.c.b16 %v1306, %v1305
    %v1741 = vpack.c.b16 %v1308, %v1307
    %v1742 = vpack.c.b16 %v1310, %v1309
    %v1743 = vpack.c.b16 %v1312, %v1311
    %v1744 = vpack.c.b16 %v1314, %v1313
    %v1745 = vpack.c.b16 %v1316, %v1315
    %v1746 = vpack.c.b16 %v1318, %v1317
    %v1747 = vpack.c.b16 %v1320, %v1319
    %v1748 = vpack.c.b16 %v1322, %v1321
    %v1749 = vpack.c.b16 %v1324, %v1323
    %v1750 = vpack.c.b16 %v1326, %v1325
    %v1751 = vpack.c.b16 %v1328, %v1327
    %v1752 = vpack.c.b16 %v1330, %v1329
    %v1753 = vpack.c.b16 %v1332, %v1331
    %v1754 = vpack.c.b16 %v1334, %v1333
    %v1755 = vpack.c.b16 %v1336, %v1335
    %v1756 = vpack.c.b16 %v1338, %v1337
    %v1757 = vpack.c.b16 %v1340, %v1339
    %v1758 = vpack.c.b16 %v1342, %v1341
    %v1759 = vpack.c.b16 %v1344, %v1343
    %v1760 = vpack.c.b16 %v1346, %v1345
    %v1761 = vpack.c.b16 %v1348, %v1347
    %v1762 = vpack.c.b16 %v1350, %v1349
    %v1763 = vpack.c.b16 %v1352, %v1351
    %v1764 = vpack.c.b16 %v1354, %v1353
    %v1765 = vpack.c.b16 %v1356, %v1355
    %v1766 = vpack.c.b16 %v1358, %v1357
    %v1767 = vpack.c.b16 %v1360, %v1359
    %v1768 = vpack.c.b16 %v1362, %v1361
    %v1769 = vpack.c.b16 %v1364, %v1363
    %v1770 = vpack.c.b16 %v1366, %v1365
    %v1771 = vpack.c.b16 %v1368, %v1367
    %v1772 = vpack.c.b16 %v1370, %v1369
    %v1773 = vpack.c.b16 %v1372, %v1371
    %v1774 = vpack.c.b16 %v1374, %v1373
    %v1775 = vpack.c.b16 %v1376, %v1375
    %v1776 = vpack.c.b16 %v1378, %v1377
    %v1777 = vpack.c.b16 %v1380, %v1379
    %v1778 = vpack.c.b16 %v1382, %v1381
    %v1779 = vpack.c.b16 %v1384, %v1383
    %v1780 = vpack.c.b16 %v1386, %v1385
    %v1781 = vpack.c.b16 %v1388, %v1387
    %v1782 = vpack.c.b16 %v1390, %v1389
    %v1783 = vpack.c.b16 %v1392, %v1391
    %v1784 = vpack.c.b16 %v1394, %v1393
    %v1785 = vpack.c.b16 %v1396, %v1395
    %v1786 = vpack.c.b16 %v1398, %v1397
    %v1787 = vpack.c.b16 %v1400, %v1399
    %v1788 = vpack.c.b16 %v1402, %v1401
    %v1789 = vpack.c.b16 %v1404, %v1403
    %v1790 = vpack.c.b16 %v1406, %v1405
    %v1791 = vpack.c.b16 %v1408, %v1407
    %v1792 = vpack.c.b16 %v1410, %v1409
    %v1793 = vpack.c.b16 %v1412, %v1411
    %v1794 = vpack.c.b16 %v1414, %v1413
    %v1795 = vpack.c.b16 %v1416, %v1415
    %v1796 = vpack.c.b16 %v1418, %v1417
    %v1797 = vpack.c.b16 %v1420, %v1419
    %v1798 = vpack.c.b16 %v1422, %v1421
    %v1799 = vpack.c.b16 %v1424, %v1423
    %v1800 = vpack.c.b16 %v1426, %v1425
    %v1801 = vpack.c.b16 %v1428, %v1427
    %v1802 = vpack.c.b16 %v1430, %v1429
    %v1803 = vpack.c.b16 %v1432, %v1431
    %v1804 = vpack.c.b16 %v1434, %v1433
    %v1805 = vpack.c.b16 %v1436, %v1435
    %v1806 = vpack.c.b16 %v1438, %v1437
    %v1807 = vpack.c.b16 %v1440, %v1439
    %v1808 = vpack.c.b16 %v1442, %v1441
    %v1809 = vpack.c.b16 %v1444, %v1443
    %v1810 = vpack.c.b16 %v1446, %v1445
    %v1811 = vpack.c.b16 %v1448, %v1447
    %v1812 = vpack.c.b16 %v1450, %v1449
    %v1813 = vpack.c.b16 %v1452, %v1451
    %v1814 = vpack.c.b16 %v1454, %v1453
    %v1815 = vpack.c.b16 %v1456, %v1455
    %v1816 = vpack.c.b16 %v1458, %v1457
    %v1817 = vpack.c.b16 %v1460, %v1459
    %v1818 = vpack.c.b16 %v1462, %v1461
    %v1819 = vpack.c.b16 %v1464, %v1463
    %v1820 = vpack.c.b16 %v1466, %v1465
    %v1821 = vpack.c.b16 %v1468, %v1467
    %v1822 = vpack.c.b16 %v1470, %v1469
    %v1823 = vpack.c.b16 %v1472, %v1471
    %v1824 = vpack.c.b16 %v1474, %v1473
    %v1825 = vpack.c.b16 %v1476, %v1475
    %v1826 = vpack.c.b16 %v1478, %v1477
    %v1827 = vpack.c.b16 %v1480, %v1479
    %v1828 = vpack.c.b16 %v1482, %v1481
    %v1829 = vpack.c.b16 %v1484, %v1483
    %v1830 = vpack.c.b16 %v1486, %v1485
    %v1831 = vpack.c.b16 %v1488, %v1487
    %v1832 = vpack.c.b16 %v1490, %v1489
    %v1833 = vpack.c.b16 %v1492, %v1491
    %v1834 = vpack.c.b16 %v1494, %v1493
    %v1835 = vpack.c.b16 %v1496, %v1495
    %v1836 = vpack.c.b16 %v1498, %v1497
    %v1837 = vpack.c.b16 %v1500, %v1499
    %v1838 = vpack.c.b16 %v1502, %v1501
    %v1839 = vpack.c.b16 %v1504, %v1503
    %v1840 = vpack.c.b16 %v1506, %v1505
    %v1841 = vpack.c.b16 %v1508, %v1507
    %v1842 = vpack.c.b16 %v1510, %v1509
    %v1843 = vpack.c.b16 %v1512, %v1511
    %v1844 = vpack.c.b16 %v1514, %v1513
    %v1845 = vpack.c.b16 %v1516, %v1515
    %v1846 = vpack.c.b16 %v1518, %v1517
    %v1847 = vpack.c.b16 %v1520, %v1519
    %v1848 = vpack.c.b16 %v1522, %v1521
    %v1849 = vpack.c.b16 %v1524, %v1523
    %v1850 = vpack.c.b16 %v1526, %v1525
    %v1851 = vpack.c.b16 %v1528, %v1527
    %v1852 = vpack.c.b16 %v1530, %v1529
    %v1853 = vpack.c.b16 %v1532, %v1531
    %v1854 = vpack.c.b16 %v1534, %v1533
    %v1855 = vpack.c.b16 %v1536, %v1535
    %v1856 = vpack.c.b16 %v1538, %v1537
    %v1857 = vpack.c.b16 %v1540, %v1539
    %v1858 = vpack.c.b16 %v1542, %v1541
    %v1859 = vpack.c.b16 %v1544, %v1543
    %v1860 = vpack.c.b16 %v1546, %v1545
    %v1861 = vpack.c.b16 %v1548, %v1547
    %v1862 = vpack.c.b16 %v1550, %v1549
    %v1863 = vpack.c.b16 %v1552, %v1551
    %v1864 = vpack.c.b16 %v1554, %v1553
    %v1865 = vpack.c.b16 %v1556, %v1555
    %v1866 = vpack.c.b16 %v1558, %v1557
    %v1867 = vpack.c.b16 %v1560, %v1559
    %v1868 = vpack.c.b16 %v1562, %v1561
    %v1869 = vpack.c.b16 %v1564, %v1563
    %v1870 = vpack.c.b16 %v1566, %v1565
    %v1871 = vpack.c.b16 %v1568, %v1567
    %v1872 = vpack.c.b16 %v1570, %v1569
    %v1873 = vpack.c.b16 %v1572, %v1571
    %v1874 = vpack.c.b16 %v1574, %v1573
    %v1875 = vpack.c.b16 %v1576, %v1575
    %v1876 = vpack.c.b16 %v1578, %v1577
    %v1877 = vpack.c.b16 %v1580, %v1579
    %v1878 = vpack.c.b16 %v1582, %v1581
    %v1879 = vpack.c.b16 %v1584, %v1583
    %v1880 = vpack.c.b16 %v1586, %v1585
    %v1881 = vpack.c.b16 %v1588, %v1587
    %v1882 = vpack.c.b16 %v1590, %v1589
    %v1883 = vpack.c.b16 %v1592, %v1591
    %v1884 = vpack.c.b16 %v1594, %v1593
    %v1885 = vpack.c.b16 %v1596, %v1595
    %v1886 = vpack.c.b16 %v1598, %v1597
    %v1887 = vpack.c.b16 %v1600, %v1599
    %v1888 = vpack.c.b16 %v1602, %v1601
    %v1889 = vpack.c.b16 %v1604, %v1603
    %v1890 = vpack.c.b16 %v1606, %v1605
    %v1891 = vpack.c.b16 %v1608, %v1607
    %v1892 = vpack.c.b16 %v1610, %v1609
    %v1893 = vpack.c.b16 %v1612, %v1611
    %v1894 = vpack.c.b16 %v1614, %v1613
    %v1895 = vpack.c.b16 %v1616, %v1615
    %v1896 = vpack.c.b16 %v1618, %v1617
    %v1897 = vpack.c.b16 %v1620, %v1619
    %v1898 = vpack.c.b16 %v1622, %v1621
    %v1899 = vpack.c.b16 %v1624, %v1623
    %v1900 = vpack.c.b16 %v1626, %v1625
    %v1901 = vpack.c.b16 %v1628, %v1627
    %v1902 = vpack.c.b16 %v1630, %v1629
    %v1903 = vpack.c.b16 %v1632, %v1631
    %v1904 = vpack.c.b16 %v1634, %v1633
    %v1905 = vpack.c.b16 %v1636, %v1635
    %v1906 = vpack.c.b16 %v1638, %v1637
    %v1907 = vpack.c.b16 %v1640, %v1639
    %v1908 = vpack.c.b16 %v1642, %v1641
    %v1909 = vpack.c.b16 %v1644, %v1643
    %v1910 = vpack.c.b16 %v1646, %v1645
    %v1911 = vpack.c.b16 %v1648, %v1647
    %v1912 = vpack.c.b16 %v1650, %v1649
    %v1913 = vpack.c.b16 %v1652, %v1651
    %v1914 = vpack.c.b16 %v1654, %v1653
    %v1915 = vpack.c.b16 %v1656, %v1655
    %v1916 = vpack.c.b16 %v1658, %v1657
    %v1917 = vpack.c.b16 %v1660, %v1659
    %v1918 = vpack.c.b16 %v1662, %v1661
    %2175 = vmatprep.subr.bf16.mxu0 0
    %2176 = vmatpush1.bf16.msra.mxu0 %v1663
    %2177 = vmatprep.subr.bf16.mxu0 0
    %2178 = vmatpush1.bf16.msra.mxu0 %v1664
    %2179 = vmatprep.subr.bf16.mxu0 0
    %2180 = vmatpush1.bf16.msra.mxu0 %v1665
    %2181 = vmatprep.subr.bf16.mxu0 0
    %2182 = vmatpush1.bf16.msra.mxu0 %v1666
    %2183 = vmatprep.subr.bf16.mxu0 0
    %2184 = vmatpush1.bf16.msra.mxu0 %v1667
    %2185 = vmatprep.subr.bf16.mxu0 0
    %2186 = vmatpush1.bf16.msra.mxu0 %v1668
    %2187 = vmatprep.subr.bf16.mxu0 0
    %2188 = vmatpush1.bf16.msra.mxu0 %v1669
    %2189 = vmatprep.subr.bf16.mxu0 0
    %2190 = vmatpush1.bf16.msra.mxu0 %v1670
    %2191 = vmatprep.subr.bf16.mxu0 0
    %2192 = vmatpush1.bf16.msra.mxu0 %v1671
    %2193 = vmatprep.subr.bf16.mxu0 0
    %2194 = vmatpush1.bf16.msra.mxu0 %v1672
    %2195 = vmatprep.subr.bf16.mxu0 0
    %2196 = vmatpush1.bf16.msra.mxu0 %v1673
    %2197 = vmatprep.subr.bf16.mxu0 0
    %2198 = vmatpush1.bf16.msra.mxu0 %v1674
    %2199 = vmatprep.subr.bf16.mxu0 0
    %2200 = vmatpush1.bf16.msra.mxu0 %v1675
    %2201 = vmatprep.subr.bf16.mxu0 0
    %2202 = vmatpush1.bf16.msra.mxu0 %v1676
    %2203 = vmatprep.subr.bf16.mxu0 0
    %2204 = vmatpush1.bf16.msra.mxu0 %v1677
    %2205 = vmatprep.subr.bf16.mxu0 0
    %2206 = vmatpush1.bf16.msra.mxu0 %v1678
    %2207 = vmatprep.mubr.bf16.mxu0 %v96
    %2208 = vmatmul.mubr.bf16.gmra.mrb[0].mxu0 %v95
    %v2209 = vpop.f32.mrb[0].mxu0
    %v2210 = vadd.f32 0.0, %v2209
    %v2211 = vpop.f32.mrb[0].mxu0
    %v2212 = vpop.f32.mrb[0].mxu0
    %v2213 = vpop.f32.mrb[0].mxu0
    %2214 = vdwg.mxu0
    %2215 = vmatprep.subr.bf16.mxu0 0
    %2216 = vmatpush1.bf16.msra.mxu0 %v1679
    %2217 = vmatprep.subr.bf16.mxu0 0
    %2218 = vmatpush1.bf16.msra.mxu0 %v1680
    %2219 = vmatprep.subr.bf16.mxu0 0
    %2220 = vmatpush1.bf16.msra.mxu0 %v1681
    %2221 = vmatprep.subr.bf16.mxu0 0
    %2222 = vmatpush1.bf16.msra.mxu0 %v1682
    %2223 = vmatprep.subr.bf16.mxu0 0
    %2224 = vmatpush1.bf16.msra.mxu0 %v1683
    %2225 = vmatprep.subr.bf16.mxu0 0
    %2226 = vmatpush1.bf16.msra.mxu0 %v1684
    %2227 = vmatprep.subr.bf16.mxu0 0
    %2228 = vmatpush1.bf16.msra.mxu0 %v1685
    %2229 = vmatprep.subr.bf16.mxu0 0
    %2230 = vmatpush1.bf16.msra.mxu0 %v1686
    %2231 = vmatprep.subr.bf16.mxu0 0
    %2232 = vmatpush1.bf16.msra.mxu0 %v1687
    %2233 = vmatprep.subr.bf16.mxu0 0
    %2234 = vmatpush1.bf16.msra.mxu0 %v1688
    %2235 = vmatprep.subr.bf16.mxu0 0
    %2236 = vmatpush1.bf16.msra.mxu0 %v1689
    %2237 = vmatprep.subr.bf16.mxu0 0
    %2238 = vmatpush1.bf16.msra.mxu0 %v1690
    %2239 = vmatprep.subr.bf16.mxu0 0
    %2240 = vmatpush1.bf16.msra.mxu0 %v1691
    %2241 = vmatprep.subr.bf16.mxu0 0
    %2242 = vmatpush1.bf16.msra.mxu0 %v1692
    %2243 = vmatprep.subr.bf16.mxu0 0
    %2244 = vmatpush1.bf16.msra.mxu0 %v1693
    %2245 = vmatprep.subr.bf16.mxu0 0
    %2246 = vmatpush1.bf16.msra.mxu0 %v1694
    %2247 = vmatprep.mubr.bf16.mxu0 %v98
    %2248 = vmatmul.mubr.bf16.gmra.mrb[0].mxu0 %v97
    %v2249 = vpop.f32.mrb[0].mxu0
    %v2250 = vadd.f32 %v2210, %v2249
    %v2251 = vpop.f32.mrb[0].mxu0
    %v2252 = vpop.f32.mrb[0].mxu0
    %v2253 = vpop.f32.mrb[0].mxu0
    %2254 = vdwg.mxu0
    %2255 = vmatprep.subr.bf16.mxu0 0
    %2256 = vmatpush1.bf16.msra.mxu0 %v1695
    %2257 = vmatprep.subr.bf16.mxu0 0
    %2258 = vmatpush1.bf16.msra.mxu0 %v1696
    %2259 = vmatprep.subr.bf16.mxu0 0
    %2260 = vmatpush1.bf16.msra.mxu0 %v1697
    %2261 = vmatprep.subr.bf16.mxu0 0
    %2262 = vmatpush1.bf16.msra.mxu0 %v1698
    %2263 = vmatprep.subr.bf16.mxu0 0
    %2264 = vmatpush1.bf16.msra.mxu0 %v1699
    %2265 = vmatprep.subr.bf16.mxu0 0
    %2266 = vmatpush1.bf16.msra.mxu0 %v1700
    %2267 = vmatprep.subr.bf16.mxu0 0
    %2268 = vmatpush1.bf16.msra.mxu0 %v1701
    %2269 = vmatprep.subr.bf16.mxu0 0
    %2270 = vmatpush1.bf16.msra.mxu0 %v1702
    %2271 = vmatprep.subr.bf16.mxu0 0
    %2272 = vmatpush1.bf16.msra.mxu0 %v1703
    %2273 = vmatprep.subr.bf16.mxu0 0
    %2274 = vmatpush1.bf16.msra.mxu0 %v1704
    %2275 = vmatprep.subr.bf16.mxu0 0
    %2276 = vmatpush1.bf16.msra.mxu0 %v1705
    %2277 = vmatprep.subr.bf16.mxu0 0
    %2278 = vmatpush1.bf16.msra.mxu0 %v1706
    %2279 = vmatprep.subr.bf16.mxu0 0
    %2280 = vmatpush1.bf16.msra.mxu0 %v1707
    %2281 = vmatprep.subr.bf16.mxu0 0
    %2282 = vmatpush1.bf16.msra.mxu0 %v1708
    %2283 = vmatprep.subr.bf16.mxu0 0
    %2284 = vmatpush1.bf16.msra.mxu0 %v1709
    %2285 = vmatprep.subr.bf16.mxu0 0
    %2286 = vmatpush1.bf16.msra.mxu0 %v1710
    %2287 = vmatprep.mubr.bf16.mxu0 %v100
    %2288 = vmatmul.mubr.bf16.gmra.mrb[0].mxu0 %v99
    %v2289 = vpop.f32.mrb[0].mxu0
    %v2290 = vadd.f32 %v2250, %v2289
    %v2291 = vpop.f32.mrb[0].mxu0
    %v2292 = vpop.f32.mrb[0].mxu0
    %v2293 = vpop.f32.mrb[0].mxu0
    %2294 = vdwg.mxu0
    %2295 = vmatprep.subr.bf16.mxu0 0
    %2296 = vmatpush1.bf16.msra.mxu0 %v1711
    %2297 = vmatprep.subr.bf16.mxu0 0
    %2298 = vmatpush1.bf16.msra.mxu0 %v1712
    %2299 = vmatprep.subr.bf16.mxu0 0
    %2300 = vmatpush1.bf16.msra.mxu0 %v1713
    %2301 = vmatprep.subr.bf16.mxu0 0
    %2302 = vmatpush1.bf16.msra.mxu0 %v1714
    %2303 = vmatprep.subr.bf16.mxu0 0
    %2304 = vmatpush1.bf16.msra.mxu0 %v1715
    %2305 = vmatprep.subr.bf16.mxu0 0
    %2306 = vmatpush1.bf16.msra.mxu0 %v1716
    %2307 = vmatprep.subr.bf16.mxu0 0
    %2308 = vmatpush1.bf16.msra.mxu0 %v1717
    %2309 = vmatprep.subr.bf16.mxu0 0
    %2310 = vmatpush1.bf16.msra.mxu0 %v1718
    %2311 = vmatprep.subr.bf16.mxu0 0
    %2312 = vmatpush1.bf16.msra.mxu0 %v1719
    %2313 = vmatprep.subr.bf16.mxu0 0
    %2314 = vmatpush1.bf16.msra.mxu0 %v1720
    %2315 = vmatprep.subr.bf16.mxu0 0
    %2316 = vmatpush1.bf16.msra.mxu0 %v1721
    %2317 = vmatprep.subr.bf16.mxu0 0
    %2318 = vmatpush1.bf16.msra.mxu0 %v1722
    %2319 = vmatprep.subr.bf16.mxu0 0
    %2320 = vmatpush1.bf16.msra.mxu0 %v1723
    %2321 = vmatprep.subr.bf16.mxu0 0
    %2322 = vmatpush1.bf16.msra.mxu0 %v1724
    %2323 = vmatprep.subr.bf16.mxu0 0
    %2324 = vmatpush1.bf16.msra.mxu0 %v1725
    %2325 = vmatprep.subr.bf16.mxu0 0
    %2326 = vmatpush1.bf16.msra.mxu0 %v1726
    %2327 = vmatprep.mubr.bf16.mxu0 %v102
    %2328 = vmatmul.mubr.bf16.gmra.mrb[0].mxu0 %v101
    %v2329 = vpop.f32.mrb[0].mxu0
    %v2330 = vadd.f32 %v2290, %v2329
    %v2331 = vpop.f32.mrb[0].mxu0
    %v2332 = vpop.f32.mrb[0].mxu0
    %v2333 = vpop.f32.mrb[0].mxu0
    %2334 = vdwg.mxu0
    %2335 = vmatprep.subr.bf16.mxu0 0
    %2336 = vmatpush1.bf16.msra.mxu0 %v1727
    %2337 = vmatprep.subr.bf16.mxu0 0
    %2338 = vmatpush1.bf16.msra.mxu0 %v1728
    %2339 = vmatprep.subr.bf16.mxu0 0
    %2340 = vmatpush1.bf16.msra.mxu0 %v1729
    %2341 = vmatprep.subr.bf16.mxu0 0
    %2342 = vmatpush1.bf16.msra.mxu0 %v1730
    %2343 = vmatprep.subr.bf16.mxu0 0
    %2344 = vmatpush1.bf16.msra.mxu0 %v1731
    %2345 = vmatprep.subr.bf16.mxu0 0
    %2346 = vmatpush1.bf16.msra.mxu0 %v1732
    %2347 = vmatprep.subr.bf16.mxu0 0
    %2348 = vmatpush1.bf16.msra.mxu0 %v1733
    %2349 = vmatprep.subr.bf16.mxu0 0
    %2350 = vmatpush1.bf16.msra.mxu0 %v1734
    %2351 = vmatprep.subr.bf16.mxu0 0
    %2352 = vmatpush1.bf16.msra.mxu0 %v1735
    %2353 = vmatprep.subr.bf16.mxu0 0
    %2354 = vmatpush1.bf16.msra.mxu0 %v1736
    %2355 = vmatprep.subr.bf16.mxu0 0
    %2356 = vmatpush1.bf16.msra.mxu0 %v1737
    %2357 = vmatprep.subr.bf16.mxu0 0
    %2358 = vmatpush1.bf16.msra.mxu0 %v1738
    %2359 = vmatprep.subr.bf16.mxu0 0
    %2360 = vmatpush1.bf16.msra.mxu0 %v1739
    %2361 = vmatprep.subr.bf16.mxu0 0
    %2362 = vmatpush1.bf16.msra.mxu0 %v1740
    %2363 = vmatprep.subr.bf16.mxu0 0
    %2364 = vmatpush1.bf16.msra.mxu0 %v1741
    %2365 = vmatprep.subr.bf16.mxu0 0
    %2366 = vmatpush1.bf16.msra.mxu0 %v1742
    %2367 = vmatprep.mubr.bf16.mxu0 %v104
    %2368 = vmatmul.mubr.bf16.gmra.mrb[0].mxu0 %v103
    %v2369 = vpop.f32.mrb[0].mxu0
    %v2370 = vadd.f32 %v2330, %v2369
    %v2371 = vpop.f32.mrb[0].mxu0
    %v2372 = vpop.f32.mrb[0].mxu0
    %v2373 = vpop.f32.mrb[0].mxu0
    %2374 = vdwg.mxu0
    %2375 = vmatprep.subr.bf16.mxu0 0
    %2376 = vmatpush1.bf16.msra.mxu0 %v1743
    %2377 = vmatprep.subr.bf16.mxu0 0
    %2378 = vmatpush1.bf16.msra.mxu0 %v1744
    %2379 = vmatprep.subr.bf16.mxu0 0
    %2380 = vmatpush1.bf16.msra.mxu0 %v1745
    %2381 = vmatprep.subr.bf16.mxu0 0
    %2382 = vmatpush1.bf16.msra.mxu0 %v1746
    %2383 = vmatprep.subr.bf16.mxu0 0
    %2384 = vmatpush1.bf16.msra.mxu0 %v1747
    %2385 = vmatprep.subr.bf16.mxu0 0
    %2386 = vmatpush1.bf16.msra.mxu0 %v1748
    %2387 = vmatprep.subr.bf16.mxu0 0
    %2388 = vmatpush1.bf16.msra.mxu0 %v1749
    %2389 = vmatprep.subr.bf16.mxu0 0
    %2390 = vmatpush1.bf16.msra.mxu0 %v1750
    %2391 = vmatprep.subr.bf16.mxu0 0
    %2392 = vmatpush1.bf16.msra.mxu0 %v1751
    %2393 = vmatprep.subr.bf16.mxu0 0
    %2394 = vmatpush1.bf16.msra.mxu0 %v1752
    %2395 = vmatprep.subr.bf16.mxu0 0
    %2396 = vmatpush1.bf16.msra.mxu0 %v1753
    %2397 = vmatprep.subr.bf16.mxu0 0
    %2398 = vmatpush1.bf16.msra.mxu0 %v1754
    %2399 = vmatprep.subr.bf16.mxu0 0
    %2400 = vmatpush1.bf16.msra.mxu0 %v1755
    %2401 = vmatprep.subr.bf16.mxu0 0
    %2402 = vmatpush1.bf16.msra.mxu0 %v1756
    %2403 = vmatprep.subr.bf16.mxu0 0
    %2404 = vmatpush1.bf16.msra.mxu0 %v1757
    %2405 = vmatprep.subr.bf16.mxu0 0
    %2406 = vmatpush1.bf16.msra.mxu0 %v1758
    %2407 = vmatprep.mubr.bf16.mxu0 %v106
    %2408 = vmatmul.mubr.bf16.gmra.mrb[0].mxu0 %v105
    %v2409 = vpop.f32.mrb[0].mxu0
    %v2410 = vadd.f32 %v2370, %v2409
    %v2411 = vpop.f32.mrb[0].mxu0
    %v2412 = vpop.f32.mrb[0].mxu0
    %v2413 = vpop.f32.mrb[0].mxu0
    %2414 = vdwg.mxu0
    %2415 = vmatprep.subr.bf16.mxu0 0
    %2416 = vmatpush1.bf16.msra.mxu0 %v1759
    %2417 = vmatprep.subr.bf16.mxu0 0
    %2418 = vmatpush1.bf16.msra.mxu0 %v1760
    %2419 = vmatprep.subr.bf16.mxu0 0
    %2420 = vmatpush1.bf16.msra.mxu0 %v1761
    %2421 = vmatprep.subr.bf16.mxu0 0
    %2422 = vmatpush1.bf16.msra.mxu0 %v1762
    %2423 = vmatprep.subr.bf16.mxu0 0
    %2424 = vmatpush1.bf16.msra.mxu0 %v1763
    %2425 = vmatprep.subr.bf16.mxu0 0
    %2426 = vmatpush1.bf16.msra.mxu0 %v1764
    %2427 = vmatprep.subr.bf16.mxu0 0
    %2428 = vmatpush1.bf16.msra.mxu0 %v1765
    %2429 = vmatprep.subr.bf16.mxu0 0
    %2430 = vmatpush1.bf16.msra.mxu0 %v1766
    %2431 = vmatprep.subr.bf16.mxu0 0
    %2432 = vmatpush1.bf16.msra.mxu0 %v1767
    %2433 = vmatprep.subr.bf16.mxu0 0
    %2434 = vmatpush1.bf16.msra.mxu0 %v1768
    %2435 = vmatprep.subr.bf16.mxu0 0
    %2436 = vmatpush1.bf16.msra.mxu0 %v1769
    %2437 = vmatprep.subr.bf16.mxu0 0
    %2438 = vmatpush1.bf16.msra.mxu0 %v1770
    %2439 = vmatprep.subr.bf16.mxu0 0
    %2440 = vmatpush1.bf16.msra.mxu0 %v1771
    %2441 = vmatprep.subr.bf16.mxu0 0
    %2442 = vmatpush1.bf16.msra.mxu0 %v1772
    %2443 = vmatprep.subr.bf16.mxu0 0
    %2444 = vmatpush1.bf16.msra.mxu0 %v1773
    %2445 = vmatprep.subr.bf16.mxu0 0
    %2446 = vmatpush1.bf16.msra.mxu0 %v1774
    %2447 = vmatprep.mubr.bf16.mxu0 %v108
    %2448 = vmatmul.mubr.bf16.gmra.mrb[0].mxu0 %v107
    %v2449 = vpop.f32.mrb[0].mxu0
    %v2450 = vadd.f32 %v2410, %v2449
    %v2451 = vpop.f32.mrb[0].mxu0
    %v2452 = vpop.f32.mrb[0].mxu0
    %v2453 = vpop.f32.mrb[0].mxu0
    %2454 = vdwg.mxu0
    %2455 = vmatprep.subr.bf16.mxu0 0
    %2456 = vmatpush1.bf16.msra.mxu0 %v1775
    %2457 = vmatprep.subr.bf16.mxu0 0
    %2458 = vmatpush1.bf16.msra.mxu0 %v1776
    %2459 = vmatprep.subr.bf16.mxu0 0
    %2460 = vmatpush1.bf16.msra.mxu0 %v1777
    %2461 = vmatprep.subr.bf16.mxu0 0
    %2462 = vmatpush1.bf16.msra.mxu0 %v1778
    %2463 = vmatprep.subr.bf16.mxu0 0
    %2464 = vmatpush1.bf16.msra.mxu0 %v1779
    %2465 = vmatprep.subr.bf16.mxu0 0
    %2466 = vmatpush1.bf16.msra.mxu0 %v1780
    %2467 = vmatprep.subr.bf16.mxu0 0
    %2468 = vmatpush1.bf16.msra.mxu0 %v1781
    %2469 = vmatprep.subr.bf16.mxu0 0
    %2470 = vmatpush1.bf16.msra.mxu0 %v1782
    %2471 = vmatprep.subr.bf16.mxu0 0
    %2472 = vmatpush1.bf16.msra.mxu0 %v1783
    %2473 = vmatprep.subr.bf16.mxu0 0
    %2474 = vmatpush1.bf16.msra.mxu0 %v1784
    %2475 = vmatprep.subr.bf16.mxu0 0
    %2476 = vmatpush1.bf16.msra.mxu0 %v1785
    %2477 = vmatprep.subr.bf16.mxu0 0
    %2478 = vmatpush1.bf16.msra.mxu0 %v1786
    %2479 = vmatprep.subr.bf16.mxu0 0
    %2480 = vmatpush1.bf16.msra.mxu0 %v1787
    %2481 = vmatprep.subr.bf16.mxu0 0
    %2482 = vmatpush1.bf16.msra.mxu0 %v1788
    %2483 = vmatprep.subr.bf16.mxu0 0
    %2484 = vmatpush1.bf16.msra.mxu0 %v1789
    %2485 = vmatprep.subr.bf16.mxu0 0
    %2486 = vmatpush1.bf16.msra.mxu0 %v1790
    %2487 = vmatprep.mubr.bf16.mxu0 %v110
    %2488 = vmatmul.mubr.bf16.gmra.mrb[0].mxu0 %v109
    %v2489 = vpop.f32.mrb[0].mxu0
    %v2490 = vadd.f32 %v2450, %v2489
    %v2491 = vpop.f32.mrb[0].mxu0
    %v2492 = vpop.f32.mrb[0].mxu0
    %v2493 = vpop.f32.mrb[0].mxu0
    %2494 = vdwg.mxu0
    %2495 = vmatprep.subr.bf16.mxu0 0
    %2496 = vmatpush1.bf16.msra.mxu0 %v1791
    %2497 = vmatprep.subr.bf16.mxu0 0
    %2498 = vmatpush1.bf16.msra.mxu0 %v1792
    %2499 = vmatprep.subr.bf16.mxu0 0
    %2500 = vmatpush1.bf16.msra.mxu0 %v1793
    %2501 = vmatprep.subr.bf16.mxu0 0
    %2502 = vmatpush1.bf16.msra.mxu0 %v1794
    %2503 = vmatprep.subr.bf16.mxu0 0
    %2504 = vmatpush1.bf16.msra.mxu0 %v1795
    %2505 = vmatprep.subr.bf16.mxu0 0
    %2506 = vmatpush1.bf16.msra.mxu0 %v1796
    %2507 = vmatprep.subr.bf16.mxu0 0
    %2508 = vmatpush1.bf16.msra.mxu0 %v1797
    %2509 = vmatprep.subr.bf16.mxu0 0
    %2510 = vmatpush1.bf16.msra.mxu0 %v1798
    %2511 = vmatprep.subr.bf16.mxu0 0
    %2512 = vmatpush1.bf16.msra.mxu0 %v1799
    %2513 = vmatprep.subr.bf16.mxu0 0
    %2514 = vmatpush1.bf16.msra.mxu0 %v1800
    %2515 = vmatprep.subr.bf16.mxu0 0
    %2516 = vmatpush1.bf16.msra.mxu0 %v1801
    %2517 = vmatprep.subr.bf16.mxu0 0
    %2518 = vmatpush1.bf16.msra.mxu0 %v1802
    %2519 = vmatprep.subr.bf16.mxu0 0
    %2520 = vmatpush1.bf16.msra.mxu0 %v1803
    %2521 = vmatprep.subr.bf16.mxu0 0
    %2522 = vmatpush1.bf16.msra.mxu0 %v1804
    %2523 = vmatprep.subr.bf16.mxu0 0
    %2524 = vmatpush1.bf16.msra.mxu0 %v1805
    %2525 = vmatprep.subr.bf16.mxu0 0
    %2526 = vmatpush1.bf16.msra.mxu0 %v1806
    %2527 = vmatprep.mubr.bf16.mxu0 %v112
    %2528 = vmatmul.mubr.bf16.gmra.mrb[0].mxu0 %v111
    %v2529 = vpop.f32.mrb[0].mxu0
    %v2530 = vadd.f32 %v2490, %v2529
    %v2531 = vpop.f32.mrb[0].mxu0
    %v2532 = vpop.f32.mrb[0].mxu0
    %v2533 = vpop.f32.mrb[0].mxu0
    %2534 = vdwg.mxu0
    %2535 = vmatprep.subr.bf16.mxu0 0
    %2536 = vmatpush1.bf16.msra.mxu0 %v1807
    %2537 = vmatprep.subr.bf16.mxu0 0
    %2538 = vmatpush1.bf16.msra.mxu0 %v1808
    %2539 = vmatprep.subr.bf16.mxu0 0
    %2540 = vmatpush1.bf16.msra.mxu0 %v1809
    %2541 = vmatprep.subr.bf16.mxu0 0
    %2542 = vmatpush1.bf16.msra.mxu0 %v1810
    %2543 = vmatprep.subr.bf16.mxu0 0
    %2544 = vmatpush1.bf16.msra.mxu0 %v1811
    %2545 = vmatprep.subr.bf16.mxu0 0
    %2546 = vmatpush1.bf16.msra.mxu0 %v1812
    %2547 = vmatprep.subr.bf16.mxu0 0
    %2548 = vmatpush1.bf16.msra.mxu0 %v1813
    %2549 = vmatprep.subr.bf16.mxu0 0
    %2550 = vmatpush1.bf16.msra.mxu0 %v1814
    %2551 = vmatprep.subr.bf16.mxu0 0
    %2552 = vmatpush1.bf16.msra.mxu0 %v1815
    %2553 = vmatprep.subr.bf16.mxu0 0
    %2554 = vmatpush1.bf16.msra.mxu0 %v1816
    %2555 = vmatprep.subr.bf16.mxu0 0
    %2556 = vmatpush1.bf16.msra.mxu0 %v1817
    %2557 = vmatprep.subr.bf16.mxu0 0
    %2558 = vmatpush1.bf16.msra.mxu0 %v1818
    %2559 = vmatprep.subr.bf16.mxu0 0
    %2560 = vmatpush1.bf16.msra.mxu0 %v1819
    %2561 = vmatprep.subr.bf16.mxu0 0
    %2562 = vmatpush1.bf16.msra.mxu0 %v1820
    %2563 = vmatprep.subr.bf16.mxu0 0
    %2564 = vmatpush1.bf16.msra.mxu0 %v1821
    %2565 = vmatprep.subr.bf16.mxu0 0
    %2566 = vmatpush1.bf16.msra.mxu0 %v1822
    %2567 = vmatprep.mubr.bf16.mxu0 %v114
    %2568 = vmatmul.mubr.bf16.gmra.mrb[0].mxu0 %v113
    %v2569 = vpop.f32.mrb[0].mxu0
    %v2570 = vadd.f32 %v2530, %v2569
    %v2571 = vpop.f32.mrb[0].mxu0
    %v2572 = vpop.f32.mrb[0].mxu0
    %v2573 = vpop.f32.mrb[0].mxu0
    %2574 = vdwg.mxu0
    %2575 = vmatprep.subr.bf16.mxu0 0
    %2576 = vmatpush1.bf16.msra.mxu0 %v1823
    %2577 = vmatprep.subr.bf16.mxu0 0
    %2578 = vmatpush1.bf16.msra.mxu0 %v1824
    %2579 = vmatprep.subr.bf16.mxu0 0
    %2580 = vmatpush1.bf16.msra.mxu0 %v1825
    %2581 = vmatprep.subr.bf16.mxu0 0
    %2582 = vmatpush1.bf16.msra.mxu0 %v1826
    %2583 = vmatprep.subr.bf16.mxu0 0
    %2584 = vmatpush1.bf16.msra.mxu0 %v1827
    %2585 = vmatprep.subr.bf16.mxu0 0
    %2586 = vmatpush1.bf16.msra.mxu0 %v1828
    %2587 = vmatprep.subr.bf16.mxu0 0
    %2588 = vmatpush1.bf16.msra.mxu0 %v1829
    %2589 = vmatprep.subr.bf16.mxu0 0
    %2590 = vmatpush1.bf16.msra.mxu0 %v1830
    %2591 = vmatprep.subr.bf16.mxu0 0
    %2592 = vmatpush1.bf16.msra.mxu0 %v1831
    %2593 = vmatprep.subr.bf16.mxu0 0
    %2594 = vmatpush1.bf16.msra.mxu0 %v1832
    %2595 = vmatprep.subr.bf16.mxu0 0
    %2596 = vmatpush1.bf16.msra.mxu0 %v1833
    %2597 = vmatprep.subr.bf16.mxu0 0
    %2598 = vmatpush1.bf16.msra.mxu0 %v1834
    %2599 = vmatprep.subr.bf16.mxu0 0
    %2600 = vmatpush1.bf16.msra.mxu0 %v1835
    %2601 = vmatprep.subr.bf16.mxu0 0
    %2602 = vmatpush1.bf16.msra.mxu0 %v1836
    %2603 = vmatprep.subr.bf16.mxu0 0
    %2604 = vmatpush1.bf16.msra.mxu0 %v1837
    %2605 = vmatprep.subr.bf16.mxu0 0
    %2606 = vmatpush1.bf16.msra.mxu0 %v1838
    %2607 = vmatprep.mubr.bf16.mxu0 %v116
    %2608 = vmatmul.mubr.bf16.gmra.mrb[0].mxu0 %v115
    %v2609 = vpop.f32.mrb[0].mxu0
    %v2610 = vadd.f32 %v2570, %v2609
    %v2611 = vpop.f32.mrb[0].mxu0
    %v2612 = vpop.f32.mrb[0].mxu0
    %v2613 = vpop.f32.mrb[0].mxu0
    %2614 = vdwg.mxu0
    %2615 = vmatprep.subr.bf16.mxu0 0
    %2616 = vmatpush1.bf16.msra.mxu0 %v1839
    %2617 = vmatprep.subr.bf16.mxu0 0
    %2618 = vmatpush1.bf16.msra.mxu0 %v1840
    %2619 = vmatprep.subr.bf16.mxu0 0
    %2620 = vmatpush1.bf16.msra.mxu0 %v1841
    %2621 = vmatprep.subr.bf16.mxu0 0
    %2622 = vmatpush1.bf16.msra.mxu0 %v1842
    %2623 = vmatprep.subr.bf16.mxu0 0
    %2624 = vmatpush1.bf16.msra.mxu0 %v1843
    %2625 = vmatprep.subr.bf16.mxu0 0
    %2626 = vmatpush1.bf16.msra.mxu0 %v1844
    %2627 = vmatprep.subr.bf16.mxu0 0
    %2628 = vmatpush1.bf16.msra.mxu0 %v1845
    %2629 = vmatprep.subr.bf16.mxu0 0
    %2630 = vmatpush1.bf16.msra.mxu0 %v1846
    %2631 = vmatprep.subr.bf16.mxu0 0
    %2632 = vmatpush1.bf16.msra.mxu0 %v1847
    %2633 = vmatprep.subr.bf16.mxu0 0
    %2634 = vmatpush1.bf16.msra.mxu0 %v1848
    %2635 = vmatprep.subr.bf16.mxu0 0
    %2636 = vmatpush1.bf16.msra.mxu0 %v1849
    %2637 = vmatprep.subr.bf16.mxu0 0
    %2638 = vmatpush1.bf16.msra.mxu0 %v1850
    %2639 = vmatprep.subr.bf16.mxu0 0
    %2640 = vmatpush1.bf16.msra.mxu0 %v1851
    %2641 = vmatprep.subr.bf16.mxu0 0
    %2642 = vmatpush1.bf16.msra.mxu0 %v1852
    %2643 = vmatprep.subr.bf16.mxu0 0
    %2644 = vmatpush1.bf16.msra.mxu0 %v1853
    %2645 = vmatprep.subr.bf16.mxu0 0
    %2646 = vmatpush1.bf16.msra.mxu0 %v1854
    %2647 = vmatprep.mubr.bf16.mxu0 %v118
    %2648 = vmatmul.mubr.bf16.gmra.mrb[0].mxu0 %v117
    %v2649 = vpop.f32.mrb[0].mxu0
    %v2650 = vadd.f32 %v2610, %v2649
    %v2651 = vpop.f32.mrb[0].mxu0
    %v2652 = vpop.f32.mrb[0].mxu0
    %v2653 = vpop.f32.mrb[0].mxu0
    %2654 = vdwg.mxu0
    %2655 = vmatprep.subr.bf16.mxu0 0
    %2656 = vmatpush1.bf16.msra.mxu0 %v1855
    %2657 = vmatprep.subr.bf16.mxu0 0
    %2658 = vmatpush1.bf16.msra.mxu0 %v1856
    %2659 = vmatprep.subr.bf16.mxu0 0
    %2660 = vmatpush1.bf16.msra.mxu0 %v1857
    %2661 = vmatprep.subr.bf16.mxu0 0
    %2662 = vmatpush1.bf16.msra.mxu0 %v1858
    %2663 = vmatprep.subr.bf16.mxu0 0
    %2664 = vmatpush1.bf16.msra.mxu0 %v1859
    %2665 = vmatprep.subr.bf16.mxu0 0
    %2666 = vmatpush1.bf16.msra.mxu0 %v1860
    %2667 = vmatprep.subr.bf16.mxu0 0
    %2668 = vmatpush1.bf16.msra.mxu0 %v1861
    %2669 = vmatprep.subr.bf16.mxu0 0
    %2670 = vmatpush1.bf16.msra.mxu0 %v1862
    %2671 = vmatprep.subr.bf16.mxu0 0
    %2672 = vmatpush1.bf16.msra.mxu0 %v1863
    %2673 = vmatprep.subr.bf16.mxu0 0
    %2674 = vmatpush1.bf16.msra.mxu0 %v1864
    %2675 = vmatprep.subr.bf16.mxu0 0
    %2676 = vmatpush1.bf16.msra.mxu0 %v1865
    %2677 = vmatprep.subr.bf16.mxu0 0
    %2678 = vmatpush1.bf16.msra.mxu0 %v1866
    %2679 = vmatprep.subr.bf16.mxu0 0
    %2680 = vmatpush1.bf16.msra.mxu0 %v1867
    %2681 = vmatprep.subr.bf16.mxu0 0
    %2682 = vmatpush1.bf16.msra.mxu0 %v1868
    %2683 = vmatprep.subr.bf16.mxu0 0
    %2684 = vmatpush1.bf16.msra.mxu0 %v1869
    %2685 = vmatprep.subr.bf16.mxu0 0
    %2686 = vmatpush1.bf16.msra.mxu0 %v1870
    %2687 = vmatprep.mubr.bf16.mxu0 %v120
    %2688 = vmatmul.mubr.bf16.gmra.mrb[0].mxu0 %v119
    %v2689 = vpop.f32.mrb[0].mxu0
    %v2690 = vadd.f32 %v2650, %v2689
    %v2691 = vpop.f32.mrb[0].mxu0
    %v2692 = vpop.f32.mrb[0].mxu0
    %v2693 = vpop.f32.mrb[0].mxu0
    %2694 = vdwg.mxu0
    %2695 = vmatprep.subr.bf16.mxu0 0
    %2696 = vmatpush1.bf16.msra.mxu0 %v1871
    %2697 = vmatprep.subr.bf16.mxu0 0
    %2698 = vmatpush1.bf16.msra.mxu0 %v1872
    %2699 = vmatprep.subr.bf16.mxu0 0
    %2700 = vmatpush1.bf16.msra.mxu0 %v1873
    %2701 = vmatprep.subr.bf16.mxu0 0
    %2702 = vmatpush1.bf16.msra.mxu0 %v1874
    %2703 = vmatprep.subr.bf16.mxu0 0
    %2704 = vmatpush1.bf16.msra.mxu0 %v1875
    %2705 = vmatprep.subr.bf16.mxu0 0
    %2706 = vmatpush1.bf16.msra.mxu0 %v1876
    %2707 = vmatprep.subr.bf16.mxu0 0
    %2708 = vmatpush1.bf16.msra.mxu0 %v1877
    %2709 = vmatprep.subr.bf16.mxu0 0
    %2710 = vmatpush1.bf16.msra.mxu0 %v1878
    %2711 = vmatprep.subr.bf16.mxu0 0
    %2712 = vmatpush1.bf16.msra.mxu0 %v1879
    %2713 = vmatprep.subr.bf16.mxu0 0
    %2714 = vmatpush1.bf16.msra.mxu0 %v1880
    %2715 = vmatprep.subr.bf16.mxu0 0
    %2716 = vmatpush1.bf16.msra.mxu0 %v1881
    %2717 = vmatprep.subr.bf16.mxu0 0
    %2718 = vmatpush1.bf16.msra.mxu0 %v1882
    %2719 = vmatprep.subr.bf16.mxu0 0
    %2720 = vmatpush1.bf16.msra.mxu0 %v1883
    %2721 = vmatprep.subr.bf16.mxu0 0
    %2722 = vmatpush1.bf16.msra.mxu0 %v1884
    %2723 = vmatprep.subr.bf16.mxu0 0
    %2724 = vmatpush1.bf16.msra.mxu0 %v1885
    %2725 = vmatprep.subr.bf16.mxu0 0
    %2726 = vmatpush1.bf16.msra.mxu0 %v1886
    %2727 = vmatprep.mubr.bf16.mxu0 %v122
    %2728 = vmatmul.mubr.bf16.gmra.mrb[0].mxu0 %v121
    %v2729 = vpop.f32.mrb[0].mxu0
    %v2730 = vadd.f32 %v2690, %v2729
    %v2731 = vpop.f32.mrb[0].mxu0
    %v2732 = vpop.f32.mrb[0].mxu0
    %v2733 = vpop.f32.mrb[0].mxu0
    %2734 = vdwg.mxu0
    %2735 = vmatprep.subr.bf16.mxu0 0
    %2736 = vmatpush1.bf16.msra.mxu0 %v1887
    %2737 = vmatprep.subr.bf16.mxu0 0
    %2738 = vmatpush1.bf16.msra.mxu0 %v1888
    %2739 = vmatprep.subr.bf16.mxu0 0
    %2740 = vmatpush1.bf16.msra.mxu0 %v1889
    %2741 = vmatprep.subr.bf16.mxu0 0
    %2742 = vmatpush1.bf16.msra.mxu0 %v1890
    %2743 = vmatprep.subr.bf16.mxu0 0
    %2744 = vmatpush1.bf16.msra.mxu0 %v1891
    %2745 = vmatprep.subr.bf16.mxu0 0
    %2746 = vmatpush1.bf16.msra.mxu0 %v1892
    %2747 = vmatprep.subr.bf16.mxu0 0
    %2748 = vmatpush1.bf16.msra.mxu0 %v1893
    %2749 = vmatprep.subr.bf16.mxu0 0
    %2750 = vmatpush1.bf16.msra.mxu0 %v1894
    %2751 = vmatprep.subr.bf16.mxu0 0
    %2752 = vmatpush1.bf16.msra.mxu0 %v1895
    %2753 = vmatprep.subr.bf16.mxu0 0
    %2754 = vmatpush1.bf16.msra.mxu0 %v1896
    %2755 = vmatprep.subr.bf16.mxu0 0
    %2756 = vmatpush1.bf16.msra.mxu0 %v1897
    %2757 = vmatprep.subr.bf16.mxu0 0
    %2758 = vmatpush1.bf16.msra.mxu0 %v1898
    %2759 = vmatprep.subr.bf16.mxu0 0
    %2760 = vmatpush1.bf16.msra.mxu0 %v1899
    %2761 = vmatprep.subr.bf16.mxu0 0
    %2762 = vmatpush1.bf16.msra.mxu0 %v1900
    %2763 = vmatprep.subr.bf16.mxu0 0
    %2764 = vmatpush1.bf16.msra.mxu0 %v1901
    %2765 = vmatprep.subr.bf16.mxu0 0
    %2766 = vmatpush1.bf16.msra.mxu0 %v1902
    %2767 = vmatprep.mubr.bf16.mxu0 %v124
    %2768 = vmatmul.mubr.bf16.gmra.mrb[0].mxu0 %v123
    %v2769 = vpop.f32.mrb[0].mxu0
    %v2770 = vadd.f32 %v2730, %v2769
    %v2771 = vpop.f32.mrb[0].mxu0
    %v2772 = vpop.f32.mrb[0].mxu0
    %v2773 = vpop.f32.mrb[0].mxu0
    %2774 = vdwg.mxu0
    %2775 = vmatprep.subr.bf16.mxu0 0
    %2776 = vmatpush1.bf16.msra.mxu0 %v1903
    %2777 = vmatprep.subr.bf16.mxu0 0
    %2778 = vmatpush1.bf16.msra.mxu0 %v1904
    %2779 = vmatprep.subr.bf16.mxu0 0
    %2780 = vmatpush1.bf16.msra.mxu0 %v1905
    %2781 = vmatprep.subr.bf16.mxu0 0
    %2782 = vmatpush1.bf16.msra.mxu0 %v1906
    %2783 = vmatprep.subr.bf16.mxu0 0
    %2784 = vmatpush1.bf16.msra.mxu0 %v1907
    %2785 = vmatprep.subr.bf16.mxu0 0
    %2786 = vmatpush1.bf16.msra.mxu0 %v1908
    %2787 = vmatprep.subr.bf16.mxu0 0
    %2788 = vmatpush1.bf16.msra.mxu0 %v1909
    %2789 = vmatprep.subr.bf16.mxu0 0
    %2790 = vmatpush1.bf16.msra.mxu0 %v1910
    %2791 = vmatprep.subr.bf16.mxu0 0
    %2792 = vmatpush1.bf16.msra.mxu0 %v1911
    %2793 = vmatprep.subr.bf16.mxu0 0
    %2794 = vmatpush1.bf16.msra.mxu0 %v1912
    %2795 = vmatprep.subr.bf16.mxu0 0
    %2796 = vmatpush1.bf16.msra.mxu0 %v1913
    %2797 = vmatprep.subr.bf16.mxu0 0
    %2798 = vmatpush1.bf16.msra.mxu0 %v1914
    %2799 = vmatprep.subr.bf16.mxu0 0
    %2800 = vmatpush1.bf16.msra.mxu0 %v1915
    %2801 = vmatprep.subr.bf16.mxu0 0
    %2802 = vmatpush1.bf16.msra.mxu0 %v1916
    %2803 = vmatprep.subr.bf16.mxu0 0
    %2804 = vmatpush1.bf16.msra.mxu0 %v1917
    %2805 = vmatprep.subr.bf16.mxu0 0
    %2806 = vmatpush1.bf16.msra.mxu0 %v1918
    %2807 = vmatprep.mubr.bf16.mxu0 %v126
    %2808 = vmatmul.mubr.bf16.gmra.mrb[0].mxu0 %v125
    %v2809 = vpop.f32.mrb[0].mxu0
    %v2810 = vadd.f32 %v2770, %v2809
    %v2811 = vpop.f32.mrb[0].mxu0
    %v2812 = vpop.f32.mrb[0].mxu0
    %v2813 = vpop.f32.mrb[0].mxu0
    %2814 = vdwg.mxu0
    %v2815 = vadd.f32 %v62, %v2810
    %2816 = vst [vmem:[#allocation2] sm:$0xff] %v2815
    // Predicated region
    $region34: #{tpu_custom_call.1} parent=1 // pred_check
      %p2817 = pneg %p57
    $region35: #{tpu_custom_call.1} parent=1 // pred_check_branch
      %2819 = sbr.rel (%p2817) target = $region37
    $region36: #{tpu_custom_call.1} parent=1 // pred_region
      %v2820 = vld [vmem:[%s3] sm:$0x1]
      %v2821 = vld [vmem:[#allocation2] sm:$0xff]
      %v2822 = vlaneseq
      %v2823 = vshrl.u32 %v2822, 7
      %v2824 = vsub.s32 0, %v2823
      %v2825 = vrot.slane %v2820, %v2824
      %v2826 = vadd.f32 %v2821, %v2825
      %v2827 = vmax.f32 %v2826, 0.0
      %v2828 = vld [vmem:[#allocation7] sm:$0xf]
      %v2829 = vld [vmem:[#allocation7 + $0x4] sm:$0xf]
      %v2830 = vld [vmem:[#allocation7 + $0x8] sm:$0xf]
      %v2831 = vld [vmem:[#allocation7 + $0xc] sm:$0xf]
      %v2832 = vld [vmem:[#allocation7 + $0x10] sm:$0xf]
      %v2833 = vld [vmem:[#allocation7 + $0x14] sm:$0xf]
      %v2834 = vld [vmem:[#allocation7 + $0x18] sm:$0xf]
      %v2835 = vld [vmem:[#allocation7 + $0x1c] sm:$0xf]
      %v2836 = vld [vmem:[#allocation7 + $0x20] sm:$0xf]
      %v2837 = vld [vmem:[#allocation7 + $0x24] sm:$0xf]
      %v2838 = vld [vmem:[#allocation7 + $0x28] sm:$0xf]
      %v2839 = vld [vmem:[#allocation7 + $0x2c] sm:$0xf]
      %v2840 = vld [vmem:[#allocation7 + $0x30] sm:$0xf]
      %v2841 = vld [vmem:[#allocation7 + $0x34] sm:$0xf]
      %v2842 = vld [vmem:[#allocation7 + $0x38] sm:$0xf]
      %v2843 = vld [vmem:[#allocation7 + $0x3c] sm:$0xf]
      %v2844 = vld [vmem:[%s3] sm:$0xff]
      %v2845 = vrot.slane %v2827, 4
      %v2846 = vadd.f32 %v2827, %v2845
      %v2847 = vrot.slane %v2846, 2
      %v2848 = vadd.f32 %v2846, %v2847
      %v2849 = vrot.slane %v2848, 1
      %v2850 = vadd.f32 %v2848, %v2849
      %v2851 = vrcp.pop 8.0
      %v2852 = vmul.f32 %v2850, %v2851
      %v2853 = vmul.f32 %v2827, %v2827
      %v2854 = vrot.slane %v2853, 4
      %v2855 = vadd.f32 %v2853, %v2854
      %v2856 = vrot.slane %v2855, 2
      %v2857 = vadd.f32 %v2855, %v2856
      %v2858 = vrot.slane %v2857, 1
      %v2859 = vadd.f32 %v2857, %v2858
      %v2860 = vmul.f32 %v2859, %v2851
      %v2861 = vmul.f32 %v2852, %v2852
      %v2862 = vsub.f32 %v2860, %v2861
      %v2863 = vmax.f32 %v2862, 0.0
      %v2864 = vsub.f32 %v2827, %v2852
      %v2865 = vadd.f32 %v2863, 1e-05
      %v2866 = vrsqrt.pop %v2865
      %v2867 = vmul.f32 %v2864, %v2866
      %v2868 = vlaneseq
      %v2869 = vshrl.u32 %v2868, 7
      %v2870 = vsub.s32 1, %v2869
      %v2871 = vrot.slane %v2844, %v2870
      %v2872 = vmul.f32 %v2867, %v2871
      %v2873 = vlaneseq
      %v2874 = vshrl.u32 %v2873, 7
      %v2875 = vsub.s32 2, %v2874
      %v2876 = vrot.slane %v2844, %v2875
      %v2877 = vadd.f32 %v2872, %v2876
      %v2878 = vpack.c.bf16 %v2877, %v2877
      %v2879 = vlaneseq
      %v2880 = vshrl.u32 %v2879, 7
      %v2881 = vsub.s32 3, %v2880
      %v2882 = vrot.slane %v2844, %v2881
      %v2899 = vunpack.c.l.b16 %v2828
      %v2900 = vunpack.c.l.b16 %v2829
      %v2901 = vunpack.c.l.b16 %v2830
      %v2902 = vunpack.c.l.b16 %v2831
      %v2903 = vunpack.c.l.b16 %v2832
      %v2904 = vunpack.c.l.b16 %v2833
      %v2905 = vunpack.c.l.b16 %v2834
      %v2906 = vunpack.c.l.b16 %v2835
      %v2907 = vunpack.c.l.b16 %v2836
      %v2908 = vunpack.c.l.b16 %v2837
      %v2909 = vunpack.c.l.b16 %v2838
      %v2910 = vunpack.c.l.b16 %v2839
      %v2911 = vunpack.c.l.b16 %v2840
      %v2912 = vunpack.c.l.b16 %v2841
      %v2913 = vunpack.c.l.b16 %v2842
      %v2914 = vunpack.c.l.b16 %v2843
      %v2915 = vpack.c.b16 %v2900, %v2899
      %v2916 = vpack.c.b16 %v2902, %v2901
      %v2917 = vpack.c.b16 %v2904, %v2903
      %v2918 = vpack.c.b16 %v2906, %v2905
      %v2919 = vpack.c.b16 %v2908, %v2907
      %v2920 = vpack.c.b16 %v2910, %v2909
      %v2921 = vpack.c.b16 %v2912, %v2911
      %v2922 = vpack.c.b16 %v2914, %v2913
      %2931 = vmatprep.subr.bf16.mxu0 0
      %2932 = vmatpush1.bf16.msra.mxu0 %v2915
      %2933 = vmatprep.subr.bf16.mxu0 0
      %2934 = vmatpush1.bf16.msra.mxu0 %v2916
      %2935 = vmatprep.subr.bf16.mxu0 0
      %2936 = vmatpush1.bf16.msra.mxu0 %v2917
      %2937 = vmatprep.subr.bf16.mxu0 0
      %2938 = vmatpush1.bf16.msra.mxu0 %v2918
      %2939 = vmatprep.subr.bf16.mxu0 0
      %2940 = vmatpush1.bf16.msra.mxu0 %v2919
      %2941 = vmatprep.subr.bf16.mxu0 0
      %2942 = vmatpush1.bf16.msra.mxu0 %v2920
      %2943 = vmatprep.subr.bf16.mxu0 0
      %2944 = vmatpush1.bf16.msra.mxu0 %v2921
      %2945 = vmatprep.subr.bf16.mxu0 0
      %2946 = vmatpush1.bf16.msra.mxu0 %v2922
      %2947 = vmatprep.subr.bf16.mxu0 0
      %2948 = vmatpush1.bf16.msra.mxu0 0
      %2949 = vmatprep.subr.bf16.mxu0 0
      %2950 = vmatpush1.bf16.msra.mxu0 0
      %2951 = vmatprep.subr.bf16.mxu0 0
      %2952 = vmatpush1.bf16.msra.mxu0 0
      %2953 = vmatprep.subr.bf16.mxu0 0
      %2954 = vmatpush1.bf16.msra.mxu0 0
      %2955 = vmatprep.subr.bf16.mxu0 0
      %2956 = vmatpush1.bf16.msra.mxu0 0
      %2957 = vmatprep.subr.bf16.mxu0 0
      %2958 = vmatpush1.bf16.msra.mxu0 0
      %2959 = vmatprep.subr.bf16.mxu0 0
      %2960 = vmatpush1.bf16.msra.mxu0 0
      %2961 = vmatprep.subr.bf16.mxu0 0
      %2962 = vmatpush1.bf16.msra.mxu0 0
      %2963 = vmatprep.mubr.bf16.mxu0 0
      %2964 = vmatmul.mubr.bf16.gmra.mrb[0].mxu0 %v2878
      %v2965 = vpop.f32.mrb[0].mxu0
      %v2966 = vadd.f32 %v2882, %v2965
      %v2967 = vpop.f32.mrb[0].mxu0
      %v2968 = vpop.f32.mrb[0].mxu0
      %v2969 = vpop.f32.mrb[0].mxu0
      %2970 = vdwg.mxu0
      %v2971 = vmax.f32 %v2966, 0.0
      %v2972 = vrot.slane %v2971, 4
      %v2973 = vadd.f32 %v2971, %v2972
      %v2974 = vrot.slane %v2973, 2
      %v2975 = vadd.f32 %v2973, %v2974
      %v2976 = vrot.slane %v2975, 1
      %v2977 = vadd.f32 %v2975, %v2976
      %v2978 = vmul.f32 %v2977, %v2851
      %v2979 = vmul.f32 %v2971, %v2971
      %v2980 = vrot.slane %v2979, 4
      %v2981 = vadd.f32 %v2979, %v2980
      %v2982 = vrot.slane %v2981, 2
      %v2983 = vadd.f32 %v2981, %v2982
      %v2984 = vrot.slane %v2983, 1
      %v2985 = vadd.f32 %v2983, %v2984
      %v2986 = vmul.f32 %v2985, %v2851
      %v2987 = vmul.f32 %v2978, %v2978
      %v2988 = vsub.f32 %v2986, %v2987
      %v2989 = vmax.f32 %v2988, 0.0
      %v2990 = vsub.f32 %v2971, %v2978
      %v2991 = vadd.f32 %v2989, 1e-05
      %v2992 = vrsqrt.pop %v2991
      %v2993 = vmul.f32 %v2990, %v2992
      %v2994 = vlaneseq
      %v2995 = vshrl.u32 %v2994, 7
      %v2996 = vsub.s32 4, %v2995
      %v2997 = vrot.slane %v2844, %v2996
      %v2998 = vmul.f32 %v2993, %v2997
      %v2999 = vlaneseq
      %v3000 = vshrl.u32 %v2999, 7
      %v3001 = vsub.s32 5, %v3000
      %v3002 = vrot.slane %v2844, %v3001
      %v3003 = vadd.f32 %v2998, %v3002
      %v3004 = vlaneseq
      %v3005 = vshrl.u32 %v3004, 7
      %v3006 = vsub.s32 6, %v3005
      %v3007 = vrot.slane %v2844, %v3006
      %v3008 = vmul.f32 %v3003, %v3007
      %3009 = vadd.xlane.f32.xlu0 %v3008
      %v3010 = vpop.xlane.xlu0 %3009
      %v3011 = vlaneseq
      %v3012 = vshrl.u32 %v3011, 7
      %v3013 = vsub.s32 7, %v3012
      %v3014 = vrot.slane %v2844, %v3013
      %v3015 = vadd.f32 %v3010, %v3014
      %v3016 = vxor.u32 %v3015, 2147483648
      %v3017 = vmul.f32 %v3016, 1.442695
      %v3018 = vpow.pop %v3017
      %v3019 = vadd.f32 %v3018, 1.0
      %v3020 = vrcp.pop %v3019
      %v3021 = vmul.f32 1.0, %v3020
      %vm3022 = vcmask 7168
      %3023 = vst.msk [vmem:[%s4] sm:$0xff] %vm3022, %v3021
    $region37: #{tpu_custom_call.1} parent=1 // pred_fallthru
      _
    // Predicated region
    $region38: #{tpu_custom_call.1} parent=1 // pred_check
      _
    $region39: #{tpu_custom_call.1} parent=1 // pred_check_branch
      %3025 = sbr.rel (0) target = $region41
    $region40: #{tpu_custom_call.1} parent=1 // pred_region
      _
    $region41: #{tpu_custom_call.1} parent=1 // pred_fallthru
      _
    // Predicated region
    $region42: #{tpu_custom_call.1} parent=1 // pred_check
      _
    $region43: #{tpu_custom_call.1} parent=1 // pred_check_branch
      %3027 = sbr.rel (0) target = $region45
    $region44: #{tpu_custom_call.1} parent=1 // pred_region
      _
    $region45: #{tpu_custom_call.1} parent=1 // pred_fallthru
      _
    %3028 = vsyncpa [#allocation4], 1
    %3029 = vsyncpa [#allocation6], 1

</llo_original>
